<compile_context>
chip_gen: v6e
topology: v6e:2x2x1
jax: 0.10.0
libtpu: 0.0.40
codegen_flags: <defaults>
</compile_context>

<pallas_src>
import functools

import jax
import jax.numpy as jnp
from jax.experimental import pallas as pl
from jax.experimental.pallas import tpu as pltpu

# Rows reserved at the top of the activation buffer: >= padding (sample 0's
# left conv padding lives here) and a sublane multiple so every staging store
# starts sublane-aligned.
_MARGIN = 8


def _round_up(x, m):
    return (x + m - 1) // m * m


def stack_cnn_kernel(x_ref, w_ref, b_ref, o_ref, buf_ref, *,
                     layer_num, kernel_size, padding, lengths,
                     seg, tb, cin_pad, c_pad):
    """One batch chunk of TB samples per grid step.

    x_ref  : [TB, SEG, CIN_PAD]   segmented channel-last input (zero-padded)
    w_ref  : [layer_num, K, CIN_PAD, CP]  W[l, k, ci, co] == torch_w_l[co, ci, k]
    b_ref  : [layer_num, 1, CP]
    o_ref  : [TB, CP]             per-sample max-pooled output
    buf_ref: [LBUF, CP]           VMEM scratch; sample i's activation for the
                                  current layer lives at rows
                                  [i*SEG + MARGIN, i*SEG + MARGIN + l_in).
    """
    K, p = kernel_size, padding
    m = tb * seg
    lbuf = buf_ref.shape[0]

    # Zero only the rows the staging stores never touch: the global left
    # margin (sample 0's left conv padding) and the small read-ahead tail.
    buf_ref[pl.ds(0, _MARGIN), :] = jnp.zeros((_MARGIN, c_pad), jnp.float32)
    n_tail = lbuf - (_MARGIN + m)
    if n_tail > 0:
        buf_ref[pl.ds(_MARGIN + m, n_tail), :] = jnp.zeros(
            (n_tail, c_pad), jnp.float32)

    # Stage the segmented input for layer 0 (one contiguous, aligned store).
    buf_ref[pl.ds(_MARGIN, m), :cin_pad] = x_ref[...].reshape(m, cin_pad)

    # Row index within each sample's segment. Rows >= l_out are junk (they mix
    # adjacent samples); zeroing them also provides the next layer's padding.
    pos = jax.lax.broadcasted_iota(jnp.int32, (tb, seg, 1), 1)

    pooled = None
    for layer in range(layer_num):
        l_out = lengths[layer + 1]

        # Conv1d as K shifted [M, Cin] @ [Cin, CP] MXU matmuls, f32 accumulate.
        acc = jnp.dot(buf_ref[pl.ds(_MARGIN - p, m), :cin_pad],
                      w_ref[layer, 0],
                      preferred_element_type=jnp.float32)
        for k in range(1, K):
            acc = acc + jnp.dot(
                buf_ref[pl.ds(_MARGIN - p + k, m), :cin_pad],
                w_ref[layer, k],
                preferred_element_type=jnp.float32)

        act = jnp.maximum(acc + b_ref[layer], 0.0)              # bias + ReLU
        act3 = jnp.where(pos < l_out, act.reshape(tb, seg, c_pad), 0.0)

        if layer < layer_num - 1:
            # Single lane-dense, sublane-aligned store per layer boundary.
            buf_ref[pl.ds(_MARGIN, m), :] = act3.reshape(m, c_pad)
        else:
            # AdaptiveMaxPool1d(1) + squeeze(-1): per-sample max over length.
            # Junk rows are zero and activations are >= 0, so this is exact.
            pooled = jnp.max(act3, axis=1)

    o_ref[...] = pooled.astype(o_ref.dtype)


def pack_params(weights, biases):
    """Pack PyTorch-layout Conv1d params once (hoisted out of the call path).

    weights[l]: [Cout, Cin_l, K], biases[l]: [Cout].
    Returns w_all [L, K, CIN_PAD, CP] and b_all [L, 1, CP] where the
    contraction dim is only sublane-aligned (mult. of 8) and the output dim is
    lane-dense (mult. of 128).
    """
    layer_num = len(weights)
    c_out, _, K = weights[0].shape
    cins = [w.shape[1] for w in weights]
    cin_pad = _round_up(max(cins), 8)
    c_pad = _round_up(c_out, 128)

    w_all = jnp.zeros((layer_num, K, cin_pad, c_pad), jnp.float32)
    b_all = jnp.zeros((layer_num, 1, c_pad), jnp.float32)
    for l, (w_l, b_l) in enumerate(zip(weights, biases)):
        cin_l = w_l.shape[1]
        w_t = jnp.transpose(w_l, (2, 1, 0))                    # [K, Cin_l, Cout]
        w_all = w_all.at[l, :, :cin_l, :c_out].set(w_t)
        b_all = b_all.at[l, 0, :c_out].set(b_l)
    return w_all, b_all


def stack_cnn(x, w_all, b_all, *, c_out, padding, block_batch=64):
    """x: [B, Cin, L] (PyTorch NCL layout). Returns [B, c_out]."""
    B, c_in, L0 = x.shape
    layer_num, K, cin_pad, c_pad = w_all.shape
    p = padding
    assert p <= _MARGIN, "padding larger than the reserved buffer margin"

    # Per-layer output lengths (stride = 1).
    lengths = [L0]
    for _ in range(layer_num):
        lengths.append(lengths[-1] + 2 * p - K + 1)
    assert all(l >= 1 for l in lengths), "conv output length must be >= 1"

    # Fixed per-sample segment (multiple of 8 sublanes) and batch tile.
    seg = _round_up(max(lengths) + p, 8)
    rows_budget = (8 * 1024 * 1024) // (c_pad * 4)   # keep scratch <= ~8 MiB
    tb_cap = max(8, (rows_budget // seg) // 8 * 8)
    tb = max(8, min(_round_up(block_batch, 8), _round_up(B, 8), tb_cap))
    b_pad = _round_up(B, tb)
    n_blocks = b_pad // tb
    m = tb * seg
    lbuf = _round_up(_MARGIN + m + max(0, K - 1 - p), 8)

    # Channel-last segmented input: sample i's data occupies rows [0, L0) of
    # its SEG-row segment; the remaining rows are the zeros that the shifted
    # matmul taps read as conv padding (this also pads the next sample's left
    # side).
    x_cl = jnp.transpose(x, (0, 2, 1)).astype(jnp.float32)     # [B, L0, Cin]
    x_seg = jnp.zeros((b_pad, seg, cin_pad), jnp.float32)
    x_seg = x_seg.at[:B, :L0, :c_in].set(x_cl)

    kernel = functools.partial(
        stack_cnn_kernel,
        layer_num=layer_num, kernel_size=K, padding=p, lengths=tuple(lengths),
        seg=seg, tb=tb, cin_pad=cin_pad, c_pad=c_pad)

    out = pl.pallas_call(
        kernel,
        out_shape=jax.ShapeDtypeStruct((b_pad, c_pad), jnp.float32),
        grid_spec=pltpu.PrefetchScalarGridSpec(
            num_scalar_prefetch=0,
            grid=(n_blocks,),
            in_specs=[
                pl.BlockSpec((tb, seg, cin_pad), lambda b: (b, 0, 0)),    # x
                pl.BlockSpec((layer_num, K, cin_pad, c_pad),
                             lambda b: (0, 0, 0, 0)),                     # W (resident)
                pl.BlockSpec((layer_num, 1, c_pad), lambda b: (0, 0, 0)), # bias
            ],
            out_specs=pl.BlockSpec((tb, c_pad), lambda b: (b, 0)),
            scratch_shapes=[pltpu.VMEM((lbuf, c_pad), jnp.float32)],
        ),
        compiler_params=pltpu.CompilerParams(
            dimension_semantics=("parallel",)),
    )(x_seg, w_all, b_all)

    return out[:B, :c_out]                       # drop batch/channel padding


def reference(x, weights, biases, padding):
    """Pure-JAX reference of StackCNN.forward (NCL layout)."""
    h = x
    for w, b in zip(weights, biases):
        h = jax.lax.conv_general_dilated(
            h, w, window_strides=(1,), padding=[(padding, padding)],
            dimension_numbers=("NCH", "OIH", "NCH"))
        h = jnp.maximum(h + b[None, :, None], 0.0)
    return jnp.max(h, axis=-1)                   # AdaptiveMaxPool1d(1) + squeeze


if __name__ == "__main__":
    key = jax.random.PRNGKey(0)

    def make_params(k, layer_num, c_in, c_out, K):
        ks = jax.random.split(k, 2 * layer_num)
        weights, biases = [], []
        for l in range(layer_num):
            cin_l = c_in if l == 0 else c_out
            bound = (cin_l * K) ** -0.5           # torch Conv1d init range
            w = jax.random.uniform(ks[2 * l], (c_out, cin_l, K),
                                   jnp.float32, -bound, bound)
            b = jax.random.uniform(ks[2 * l + 1], (c_out,),
                                   jnp.float32, -bound, bound)
            weights.append(w)
            biases.append(b)
        return weights, biases

    # Config A: StackCNN(layer_num=3, in=4, out=32, kernel_size=3, padding=1)
    # Config B: StackCNN(layer_num=2, in=4, out=32, kernel_size=5, padding=0)
    cases = [
        dict(layer_num=3, c_in=4, c_out=32, K=3, pad=1, B=2, L=16),
        dict(layer_num=2, c_in=4, c_out=32, K=5, pad=0, B=2, L=16),
    ]

    for i, cfg in enumerate(cases):
        kx, kw, key = jax.random.split(key, 3)
        x = jax.random.normal(kx, (cfg["B"], cfg["c_in"], cfg["L"]), jnp.float32)
        weights, biases = make_params(kw, cfg["layer_num"], cfg["c_in"],
                                      cfg["c_out"], cfg["K"])

        # Param packing hoisted out of the per-call path (done once per set).
        w_all, b_all = pack_params(weights, biases)
        fwd = jax.jit(functools.partial(stack_cnn, c_out=cfg["c_out"],
                                        padding=cfg["pad"]))

        out = jax.block_until_ready(fwd(x, w_all, b_all))

        ref = reference(x, weights, biases, padding=cfg["pad"])
        assert out.shape == (cfg["B"], cfg["c_out"]), (i, out.shape)
        assert jnp.allclose(out, ref, atol=1e-4, rtol=1e-4), f"mismatch in case {i}"

    print("KERNEL_OK")
</pallas_src>

<mosaic_0001>
module attributes {stable_mosaic.version = 11 : i64} {
  func.func @stack_cnn_kernel(%arg0: i32, %arg1: memref<8x24x32xf32, #tpu.memory_space<vmem>>, %arg2: memref<3x3x32x128xf32, #tpu.memory_space<vmem>>, %arg3: memref<3x1x128xf32, #tpu.memory_space<vmem>>, %arg4: memref<8x128xf32, #tpu.memory_space<vmem>>, %arg5: memref<208x128xf32, #tpu.memory_space<vmem>>) attributes {dimension_semantics = [#tpu.dimension_semantics<parallel>], iteration_bounds = array<i64: 1>, scalar_prefetch = 0 : i64, scratch_operands = 1 : i64, tpu.core_type = #tpu.core_type<tc>, window_params = [{transform_indices = @transform_0, window_bounds = array<i64: 8, 24, 32>}, {pipeline_mode = #tpu.pipeline_mode<synchronous>, transform_indices = @transform_1, window_bounds = array<i64: 3, 3, 32, 128>}, {pipeline_mode = #tpu.pipeline_mode<synchronous>, transform_indices = @transform_2, window_bounds = array<i64: 3, 1, 128>}, {transform_indices = @transform_3, window_bounds = array<i64: 8, 128>}]} {
    %cst = arith.constant 0.000000e+00 : f32
    %0 = vector.broadcast %cst : f32 to vector<8x128xf32>
    %c0 = arith.constant 0 : index
    %c0_0 = arith.constant 0 : index
    %1 = vector.load %arg5[%c0, %c0_0] : memref<208x128xf32, #tpu.memory_space<vmem>>, vector<8x128xf32>
    tpu.vector_store %arg5[%c0, %c0_0], %0 {strides = array<i32>} : memref<208x128xf32, #tpu.memory_space<vmem>>, vector<8x128xf32>,
    %cst_1 = arith.constant 0.000000e+00 : f32
    %2 = vector.broadcast %cst_1 : f32 to vector<8x128xf32>
    %c200 = arith.constant 200 : index
    %c0_2 = arith.constant 0 : index
    %3 = vector.load %arg5[%c200, %c0_2] : memref<208x128xf32, #tpu.memory_space<vmem>>, vector<8x128xf32>
    tpu.vector_store %arg5[%c200, %c0_2], %2 {strides = array<i32>} : memref<208x128xf32, #tpu.memory_space<vmem>>, vector<8x128xf32>,
    %c0_3 = arith.constant 0 : index
    %c0_4 = arith.constant 0 : index
    %c0_5 = arith.constant 0 : index
    %4 = vector.load %arg1[%c0_3, %c0_4, %c0_5] : memref<8x24x32xf32, #tpu.memory_space<vmem>>, vector<8x24x32xf32>
    %5 = vector.shape_cast %4 : vector<8x24x32xf32> to vector<192x32xf32>
    %c8 = arith.constant 8 : index
    %c0_6 = arith.constant 0 : index
    %6 = vector.load %arg5[%c8, %c0_6] : memref<208x128xf32, #tpu.memory_space<vmem>>, vector<192x32xf32>
    tpu.vector_store %arg5[%c8, %c0_6], %5 {strides = array<i32>} : memref<208x128xf32, #tpu.memory_space<vmem>>, vector<192x32xf32>,
    %7 = tpu.iota {dimensions = array<i32: 1>} : vector<8x24x1xi32>
    %c7 = arith.constant 7 : index
    %c0_7 = arith.constant 0 : index
    %8 = vector.load %arg5[%c7, %c0_7] : memref<208x128xf32, #tpu.memory_space<vmem>>, vector<192x32xf32>
    %c0_8 = arith.constant 0 : index
    %c0_9 = arith.constant 0 : index
    %c0_10 = arith.constant 0 : index
    %c0_11 = arith.constant 0 : index
    %9 = vector.load %arg2[%c0_8, %c0_9, %c0_10, %c0_11] : memref<3x3x32x128xf32, #tpu.memory_space<vmem>>, vector<1x1x32x128xf32>
    %10 = vector.shape_cast %9 : vector<1x1x32x128xf32> to vector<32x128xf32>
    %cst_12 = arith.constant dense<0.000000e+00> : vector<192x128xf32>
    %11 = tpu.matmul %8, %10, %cst_12 {dimension_numbers = #tpu.dot_dimension_numbers<[1], [0], [0], [1], [0, 0, 1, 1], [], []>} : vector<192x32xf32>, vector<32x128xf32>, vector<192x128xf32> -> vector<192x128xf32>
    %c8_13 = arith.constant 8 : index
    %c0_14 = arith.constant 0 : index
    %12 = vector.load %arg5[%c8_13, %c0_14] : memref<208x128xf32, #tpu.memory_space<vmem>>, vector<192x32xf32>
    %c0_15 = arith.constant 0 : index
    %c1 = arith.constant 1 : index
    %c0_16 = arith.constant 0 : index
    %c0_17 = arith.constant 0 : index
    %13 = vector.load %arg2[%c0_15, %c1, %c0_16, %c0_17] : memref<3x3x32x128xf32, #tpu.memory_space<vmem>>, vector<1x1x32x128xf32>
    %14 = vector.shape_cast %13 : vector<1x1x32x128xf32> to vector<32x128xf32>
    %cst_18 = arith.constant dense<0.000000e+00> : vector<192x128xf32>
    %15 = tpu.matmul %12, %14, %cst_18 {dimension_numbers = #tpu.dot_dimension_numbers<[1], [0], [0], [1], [0, 0, 1, 1], [], []>} : vector<192x32xf32>, vector<32x128xf32>, vector<192x128xf32> -> vector<192x128xf32>
    %16 = arith.addf %11, %15 : vector<192x128xf32>
    %c9 = arith.constant 9 : index
    %c0_19 = arith.constant 0 : index
    %17 = vector.load %arg5[%c9, %c0_19] : memref<208x128xf32, #tpu.memory_space<vmem>>, vector<192x32xf32>
    %c0_20 = arith.constant 0 : index
    %c2 = arith.constant 2 : index
    %c0_21 = arith.constant 0 : index
    %c0_22 = arith.constant 0 : index
    %18 = vector.load %arg2[%c0_20, %c2, %c0_21, %c0_22] : memref<3x3x32x128xf32, #tpu.memory_space<vmem>>, vector<1x1x32x128xf32>
    %19 = vector.shape_cast %18 : vector<1x1x32x128xf32> to vector<32x128xf32>
    %cst_23 = arith.constant dense<0.000000e+00> : vector<192x128xf32>
    %20 = tpu.matmul %17, %19, %cst_23 {dimension_numbers = #tpu.dot_dimension_numbers<[1], [0], [0], [1], [0, 0, 1, 1], [], []>} : vector<192x32xf32>, vector<32x128xf32>, vector<192x128xf32> -> vector<192x128xf32>
    %21 = arith.addf %16, %20 : vector<192x128xf32>
    %c0_24 = arith.constant 0 : index
    %c0_25 = arith.constant 0 : index
    %c0_26 = arith.constant 0 : index
    %22 = vector.load %arg3[%c0_24, %c0_25, %c0_26] : memref<3x1x128xf32, #tpu.memory_space<vmem>>, vector<1x1x128xf32>
    %23 = vector.shape_cast %22 : vector<1x1x128xf32> to vector<1x128xf32>
    %24 = vector.broadcast %23 : vector<1x128xf32> to vector<192x128xf32>
    %25 = arith.addf %21, %24 : vector<192x128xf32>
    %cst_27 = arith.constant 0.000000e+00 : f32
    %26 = vector.broadcast %cst_27 : f32 to vector<192x128xf32>
    %27 = arith.maximumf %25, %26 : vector<192x128xf32>
    %c16_i32 = arith.constant 16 : i32
    %28 = vector.broadcast %c16_i32 : i32 to vector<8x24x1xi32>
    %29 = arith.cmpi slt, %7, %28 : vector<8x24x1xi32>
    %30 = vector.shape_cast %27 : vector<192x128xf32> to vector<8x24x128xf32>
    %cst_28 = arith.constant 0.000000e+00 : f32
    %31 = vector.shape_cast %29 : vector<8x24x1xi1> to vector<8x24x1xi1>
    %32 = vector.broadcast %31 : vector<8x24x1xi1> to vector<8x24x128xi1>
    %33 = vector.broadcast %cst_28 : f32 to vector<8x24x128xf32>
    %34 = arith.select %32, %30, %33 : vector<8x24x128xi1>, vector<8x24x128xf32>
    %35 = vector.shape_cast %34 : vector<8x24x128xf32> to vector<192x128xf32>
    %c8_29 = arith.constant 8 : index
    %c0_30 = arith.constant 0 : index
    %36 = vector.load %arg5[%c8_29, %c0_30] : memref<208x128xf32, #tpu.memory_space<vmem>>, vector<192x128xf32>
    tpu.vector_store %arg5[%c8_29, %c0_30], %35 {strides = array<i32>} : memref<208x128xf32, #tpu.memory_space<vmem>>, vector<192x128xf32>,
    %c7_31 = arith.constant 7 : index
    %c0_32 = arith.constant 0 : index
    %37 = vector.load %arg5[%c7_31, %c0_32] : memref<208x128xf32, #tpu.memory_space<vmem>>, vector<192x32xf32>
    %c1_33 = arith.constant 1 : index
    %c0_34 = arith.constant 0 : index
    %c0_35 = arith.constant 0 : index
    %c0_36 = arith.constant 0 : index
    %38 = vector.load %arg2[%c1_33, %c0_34, %c0_35, %c0_36] : memref<3x3x32x128xf32, #tpu.memory_space<vmem>>, vector<1x1x32x128xf32>
    %39 = vector.shape_cast %38 : vector<1x1x32x128xf32> to vector<32x128xf32>
    %cst_37 = arith.constant dense<0.000000e+00> : vector<192x128xf32>
    %40 = tpu.matmul %37, %39, %cst_37 {dimension_numbers = #tpu.dot_dimension_numbers<[1], [0], [0], [1], [0, 0, 1, 1], [], []>} : vector<192x32xf32>, vector<32x128xf32>, vector<192x128xf32> -> vector<192x128xf32>
    %c8_38 = arith.constant 8 : index
    %c0_39 = arith.constant 0 : index
    %41 = vector.load %arg5[%c8_38, %c0_39] : memref<208x128xf32, #tpu.memory_space<vmem>>, vector<192x32xf32>
    %c1_40 = arith.constant 1 : index
    %c1_41 = arith.constant 1 : index
    %c0_42 = arith.constant 0 : index
    %c0_43 = arith.constant 0 : index
    %42 = vector.load %arg2[%c1_40, %c1_41, %c0_42, %c0_43] : memref<3x3x32x128xf32, #tpu.memory_space<vmem>>, vector<1x1x32x128xf32>
    %43 = vector.shape_cast %42 : vector<1x1x32x128xf32> to vector<32x128xf32>
    %cst_44 = arith.constant dense<0.000000e+00> : vector<192x128xf32>
    %44 = tpu.matmul %41, %43, %cst_44 {dimension_numbers = #tpu.dot_dimension_numbers<[1], [0], [0], [1], [0, 0, 1, 1], [], []>} : vector<192x32xf32>, vector<32x128xf32>, vector<192x128xf32> -> vector<192x128xf32>
    %45 = arith.addf %40, %44 : vector<192x128xf32>
    %c9_45 = arith.constant 9 : index
    %c0_46 = arith.constant 0 : index
    %46 = vector.load %arg5[%c9_45, %c0_46] : memref<208x128xf32, #tpu.memory_space<vmem>>, vector<192x32xf32>
    %c1_47 = arith.constant 1 : index
    %c2_48 = arith.constant 2 : index
    %c0_49 = arith.constant 0 : index
    %c0_50 = arith.constant 0 : index
    %47 = vector.load %arg2[%c1_47, %c2_48, %c0_49, %c0_50] : memref<3x3x32x128xf32, #tpu.memory_space<vmem>>, vector<1x1x32x128xf32>
    %48 = vector.shape_cast %47 : vector<1x1x32x128xf32> to vector<32x128xf32>
    %cst_51 = arith.constant dense<0.000000e+00> : vector<192x128xf32>
    %49 = tpu.matmul %46, %48, %cst_51 {dimension_numbers = #tpu.dot_dimension_numbers<[1], [0], [0], [1], [0, 0, 1, 1], [], []>} : vector<192x32xf32>, vector<32x128xf32>, vector<192x128xf32> -> vector<192x128xf32>
    %50 = arith.addf %45, %49 : vector<192x128xf32>
    %c1_52 = arith.constant 1 : index
    %c0_53 = arith.constant 0 : index
    %c0_54 = arith.constant 0 : index
    %51 = vector.load %arg3[%c1_52, %c0_53, %c0_54] : memref<3x1x128xf32, #tpu.memory_space<vmem>>, vector<1x1x128xf32>
    %52 = vector.shape_cast %51 : vector<1x1x128xf32> to vector<1x128xf32>
    %53 = vector.broadcast %52 : vector<1x128xf32> to vector<192x128xf32>
    %54 = arith.addf %50, %53 : vector<192x128xf32>
    %cst_55 = arith.constant 0.000000e+00 : f32
    %55 = vector.broadcast %cst_55 : f32 to vector<192x128xf32>
    %56 = arith.maximumf %54, %55 : vector<192x128xf32>
    %c16_i32_56 = arith.constant 16 : i32
    %57 = vector.broadcast %c16_i32_56 : i32 to vector<8x24x1xi32>
    %58 = arith.cmpi slt, %7, %57 : vector<8x24x1xi32>
    %59 = vector.shape_cast %56 : vector<192x128xf32> to vector<8x24x128xf32>
    %cst_57 = arith.constant 0.000000e+00 : f32
    %60 = vector.shape_cast %58 : vector<8x24x1xi1> to vector<8x24x1xi1>
    %61 = vector.broadcast %60 : vector<8x24x1xi1> to vector<8x24x128xi1>
    %62 = vector.broadcast %cst_57 : f32 to vector<8x24x128xf32>
    %63 = arith.select %61, %59, %62 : vector<8x24x128xi1>, vector<8x24x128xf32>
    %64 = vector.shape_cast %63 : vector<8x24x128xf32> to vector<192x128xf32>
    %c8_58 = arith.constant 8 : index
    %c0_59 = arith.constant 0 : index
    %65 = vector.load %arg5[%c8_58, %c0_59] : memref<208x128xf32, #tpu.memory_space<vmem>>, vector<192x128xf32>
    tpu.vector_store %arg5[%c8_58, %c0_59], %64 {strides = array<i32>} : memref<208x128xf32, #tpu.memory_space<vmem>>, vector<192x128xf32>,
    %c7_60 = arith.constant 7 : index
    %c0_61 = arith.constant 0 : index
    %66 = vector.load %arg5[%c7_60, %c0_61] : memref<208x128xf32, #tpu.memory_space<vmem>>, vector<192x32xf32>
    %c2_62 = arith.constant 2 : index
    %c0_63 = arith.constant 0 : index
    %c0_64 = arith.constant 0 : index
    %c0_65 = arith.constant 0 : index
    %67 = vector.load %arg2[%c2_62, %c0_63, %c0_64, %c0_65] : memref<3x3x32x128xf32, #tpu.memory_space<vmem>>, vector<1x1x32x128xf32>
    %68 = vector.shape_cast %67 : vector<1x1x32x128xf32> to vector<32x128xf32>
    %cst_66 = arith.constant dense<0.000000e+00> : vector<192x128xf32>
    %69 = tpu.matmul %66, %68, %cst_66 {dimension_numbers = #tpu.dot_dimension_numbers<[1], [0], [0], [1], [0, 0, 1, 1], [], []>} : vector<192x32xf32>, vector<32x128xf32>, vector<192x128xf32> -> vector<192x128xf32>
    %c8_67 = arith.constant 8 : index
    %c0_68 = arith.constant 0 : index
    %70 = vector.load %arg5[%c8_67, %c0_68] : memref<208x128xf32, #tpu.memory_space<vmem>>, vector<192x32xf32>
    %c2_69 = arith.constant 2 : index
    %c1_70 = arith.constant 1 : index
    %c0_71 = arith.constant 0 : index
    %c0_72 = arith.constant 0 : index
    %71 = vector.load %arg2[%c2_69, %c1_70, %c0_71, %c0_72] : memref<3x3x32x128xf32, #tpu.memory_space<vmem>>, vector<1x1x32x128xf32>
    %72 = vector.shape_cast %71 : vector<1x1x32x128xf32> to vector<32x128xf32>
    %cst_73 = arith.constant dense<0.000000e+00> : vector<192x128xf32>
    %73 = tpu.matmul %70, %72, %cst_73 {dimension_numbers = #tpu.dot_dimension_numbers<[1], [0], [0], [1], [0, 0, 1, 1], [], []>} : vector<192x32xf32>, vector<32x128xf32>, vector<192x128xf32> -> vector<192x128xf32>
    %74 = arith.addf %69, %73 : vector<192x128xf32>
    %c9_74 = arith.constant 9 : index
    %c0_75 = arith.constant 0 : index
    %75 = vector.load %arg5[%c9_74, %c0_75] : memref<208x128xf32, #tpu.memory_space<vmem>>, vector<192x32xf32>
    %c2_76 = arith.constant 2 : index
    %c2_77 = arith.constant 2 : index
    %c0_78 = arith.constant 0 : index
    %c0_79 = arith.constant 0 : index
    %76 = vector.load %arg2[%c2_76, %c2_77, %c0_78, %c0_79] : memref<3x3x32x128xf32, #tpu.memory_space<vmem>>, vector<1x1x32x128xf32>
    %77 = vector.shape_cast %76 : vector<1x1x32x128xf32> to vector<32x128xf32>
    %cst_80 = arith.constant dense<0.000000e+00> : vector<192x128xf32>
    %78 = tpu.matmul %75, %77, %cst_80 {dimension_numbers = #tpu.dot_dimension_numbers<[1], [0], [0], [1], [0, 0, 1, 1], [], []>} : vector<192x32xf32>, vector<32x128xf32>, vector<192x128xf32> -> vector<192x128xf32>
    %79 = arith.addf %74, %78 : vector<192x128xf32>
    %c2_81 = arith.constant 2 : index
    %c0_82 = arith.constant 0 : index
    %c0_83 = arith.constant 0 : index
    %80 = vector.load %arg3[%c2_81, %c0_82, %c0_83] : memref<3x1x128xf32, #tpu.memory_space<vmem>>, vector<1x1x128xf32>
    %81 = vector.shape_cast %80 : vector<1x1x128xf32> to vector<1x128xf32>
    %82 = vector.broadcast %81 : vector<1x128xf32> to vector<192x128xf32>
    %83 = arith.addf %79, %82 : vector<192x128xf32>
    %cst_84 = arith.constant 0.000000e+00 : f32
    %84 = vector.broadcast %cst_84 : f32 to vector<192x128xf32>
    %85 = arith.maximumf %83, %84 : vector<192x128xf32>
    %c16_i32_85 = arith.constant 16 : i32
    %86 = vector.broadcast %c16_i32_85 : i32 to vector<8x24x1xi32>
    %87 = arith.cmpi slt, %7, %86 : vector<8x24x1xi32>
    %88 = vector.shape_cast %85 : vector<192x128xf32> to vector<8x24x128xf32>
    %cst_86 = arith.constant 0.000000e+00 : f32
    %89 = vector.shape_cast %87 : vector<8x24x1xi1> to vector<8x24x1xi1>
    %90 = vector.broadcast %89 : vector<8x24x1xi1> to vector<8x24x128xi1>
    %91 = vector.broadcast %cst_86 : f32 to vector<8x24x128xf32>
    %92 = arith.select %90, %88, %91 : vector<8x24x128xi1>, vector<8x24x128xf32>
    %cst_87 = arith.constant dense<0xFF800000> : vector<8x128xf32>
    %93 = vector.multi_reduction <maximumf>, %92, %cst_87 [1] : vector<8x24x128xf32> to vector<8x128xf32>
    %c0_88 = arith.constant 0 : index
    %c0_89 = arith.constant 0 : index
    %94 = vector.load %arg4[%c0_88, %c0_89] : memref<8x128xf32, #tpu.memory_space<vmem>>, vector<8x128xf32>
    tpu.vector_store %arg4[%c0_88, %c0_89], %93 {strides = array<i32>} : memref<8x128xf32, #tpu.memory_space<vmem>>, vector<8x128xf32>,
    return
  }
  func.func @transform_0(%arg0: i32) -> (i32, i32, i32) {
    %c0_i32 = arith.constant 0 : i32
    %c0_i32_0 = arith.constant 0 : i32
    %c0_i32_1 = arith.constant 0 : i32
    return %arg0, %c0_i32, %c0_i32_0 : i32, i32, i32
  }
  func.func @transform_1(%arg0: i32) -> (i32, i32, i32, i32) {
    %c0_i32 = arith.constant 0 : i32
    %c0_i32_0 = arith.constant 0 : i32
    %c0_i32_1 = arith.constant 0 : i32
    %c0_i32_2 = arith.constant 0 : i32
    %c0_i32_3 = arith.constant 0 : i32
    return %c0_i32, %c0_i32_0, %c0_i32_1, %c0_i32_2 : i32, i32, i32, i32
  }
  func.func @transform_2(%arg0: i32) -> (i32, i32, i32) {
    %c0_i32 = arith.constant 0 : i32
    %c0_i32_0 = arith.constant 0 : i32
    %c0_i32_1 = arith.constant 0 : i32
    %c0_i32_2 = arith.constant 0 : i32
    return %c0_i32, %c0_i32_0, %c0_i32_1 : i32, i32, i32
  }
  func.func @transform_3(%arg0: i32) -> (i32, i32) {
    %c0_i32 = arith.constant 0 : i32
    %c0_i32_0 = arith.constant 0 : i32
    return %arg0, %c0_i32 : i32, i32
  }
}

</mosaic_0001>

<llo_original>
// kernel: stack_cnn.1
$region0: #{stack_cnn.1}
  #allocation0 [shape = 'u32[]', space=smem, size = 0x4, offset = 0x4, fixed_abs, tag = 'smem constant byte address 0x4 - core index']
  #allocation1 [shape = 'u32[144,128]{1,0:T(1,128)}', space=vmem, size = 0x12000, scoped, tag = 'internal scratch']
  #allocation2 [shape = 'f32[208,128]{1,0:T(8,128)}', space=vmem, size = 0x1a000, scoped, tag = 'scratch operand']
  %s0 = inlined_call_operand.vmem [shape: f32[8,24,32], index: 0, kind: input, shape index: {}]
  %s1 = inlined_call_operand.hbm [shape: f32[3,3,32,128], index: 1, kind: input, shape index: {}]
  %s2 = inlined_call_operand.vmem [shape: f32[3,1,128], index: 2, kind: input, shape index: {}]
  %s3 = inlined_call_operand.vmem [shape: f32[8,128], index: 3, kind: output, shape index: {}]
  %s4 = sld [smem:[#allocation0]]
  $region26: #{stack_cnn.1} parent=0
    _
  %s6 = ssub.s32 1, %s4
  %s7 = scalar_select 0, %s6, %s4
  $region1: #{stack_cnn.1} parent=0
    #allocation3 [shape = 'u8[147456]{0}', space=vmem, size = 0x24000, scoped, tag = 'input window, operand 1, single buffered']
    #allocation4 [shape = 's32[1]{0}', space=sflag, size = 0x4, scoped, tag = 'scoped memory for stack_cnn.1']
    %8 = vsyncpa [#allocation4], 0
    // Predicated region
    $region2: #{stack_cnn.1} parent=1 // pred_check
      _
    $region3: #{stack_cnn.1} parent=1 // pred_check_branch
      %10 = sbr.rel (0) target = $region5
    $region4: #{stack_cnn.1} parent=1 // pred_region
      _
    $region5: #{stack_cnn.1} parent=1 // pred_fallthru
      _
    // Predicated region
    $region6: #{stack_cnn.1} parent=1 // pred_check
      _
    $region7: #{stack_cnn.1} parent=1 // pred_check_branch
      %12 = sbr.rel (0) target = $region9
    $region8: #{stack_cnn.1} parent=1 // pred_region
      %s14 = ssub.s32 4608, 4608
      %15 = vsyncadd [#allocation4], %s14
      %s16 = sshll.u32 [#allocation3], 4
      %s17 = int_to_ptr.vmem [resolvable:$true] %s16
      %22 = dma.hbm_to_vmem [thread:$0]  %s1, 4608, %s17, [#allocation4], 128, 128, 8
    $region9: #{stack_cnn.1} parent=1 // pred_fallthru
      _
    // Predicated region
    $region10: #{stack_cnn.1} parent=1 // pred_check
      _
    $region11: #{stack_cnn.1} parent=1 // pred_check_branch
      %24 = sbr.rel (0) target = $region13
    $region12: #{stack_cnn.1} parent=1 // pred_region
      _
    $region13: #{stack_cnn.1} parent=1 // pred_fallthru
      _
    // Predicated region
    $region14: #{stack_cnn.1} parent=1 // pred_check
      _
    $region15: #{stack_cnn.1} parent=1 // pred_check_branch
      %26 = sbr.rel (0) target = $region17
    $region16: #{stack_cnn.1} parent=1 // pred_region
      %27 = dma.done [#allocation4], 4608
    $region17: #{stack_cnn.1} parent=1 // pred_fallthru
      _
    %28 = vst [vmem:[#allocation2] sm:$0xff] 0.0
    %29 = vst [vmem:[#allocation2 + $0xc8] sm:$0xff] 0.0
    %v30 = vld [vmem:[%s0] sm:$0xff]
    %v31 = vld [vmem:[%s0 + $0x8] sm:$0xff]
    %v32 = vld [vmem:[%s0 + $0x10] sm:$0xff]
    %v33 = vld [vmem:[%s0 + $0x18] sm:$0xff]
    %v34 = vld [vmem:[%s0 + $0x20] sm:$0xff]
    %v35 = vld [vmem:[%s0 + $0x28] sm:$0xff]
    %v36 = vld [vmem:[%s0 + $0x30] sm:$0xff]
    %v37 = vld [vmem:[%s0 + $0x38] sm:$0xff]
    %v38 = vld [vmem:[%s0 + $0x40] sm:$0xff]
    %v39 = vld [vmem:[%s0 + $0x48] sm:$0xff]
    %v40 = vld [vmem:[%s0 + $0x50] sm:$0xff]
    %v41 = vld [vmem:[%s0 + $0x58] sm:$0xff]
    %v42 = vld [vmem:[%s0 + $0x60] sm:$0xff]
    %v43 = vld [vmem:[%s0 + $0x68] sm:$0xff]
    %v44 = vld [vmem:[%s0 + $0x70] sm:$0xff]
    %v45 = vld [vmem:[%s0 + $0x78] sm:$0xff]
    %v46 = vld [vmem:[%s0 + $0x80] sm:$0xff]
    %v47 = vld [vmem:[%s0 + $0x88] sm:$0xff]
    %v48 = vld [vmem:[%s0 + $0x90] sm:$0xff]
    %v49 = vld [vmem:[%s0 + $0x98] sm:$0xff]
    %v50 = vld [vmem:[%s0 + $0xa0] sm:$0xff]
    %v51 = vld [vmem:[%s0 + $0xa8] sm:$0xff]
    %v52 = vld [vmem:[%s0 + $0xb0] sm:$0xff]
    %v53 = vld [vmem:[%s0 + $0xb8] sm:$0xff]
    %vm54 = vcmask 261120
    %55 = vst.msk [vmem:[#allocation2 + $0x8] sm:$0xff] %vm54, %v30
    %56 = vst.msk [vmem:[#allocation2 + $0x10] sm:$0xff] %vm54, %v31
    %57 = vst.msk [vmem:[#allocation2 + $0x18] sm:$0xff] %vm54, %v32
    %58 = vst.msk [vmem:[#allocation2 + $0x20] sm:$0xff] %vm54, %v33
    %59 = vst.msk [vmem:[#allocation2 + $0x28] sm:$0xff] %vm54, %v34
    %60 = vst.msk [vmem:[#allocation2 + $0x30] sm:$0xff] %vm54, %v35
    %61 = vst.msk [vmem:[#allocation2 + $0x38] sm:$0xff] %vm54, %v36
    %62 = vst.msk [vmem:[#allocation2 + $0x40] sm:$0xff] %vm54, %v37
    %63 = vst.msk [vmem:[#allocation2 + $0x48] sm:$0xff] %vm54, %v38
    %64 = vst.msk [vmem:[#allocation2 + $0x50] sm:$0xff] %vm54, %v39
    %65 = vst.msk [vmem:[#allocation2 + $0x58] sm:$0xff] %vm54, %v40
    %66 = vst.msk [vmem:[#allocation2 + $0x60] sm:$0xff] %vm54, %v41
    %67 = vst.msk [vmem:[#allocation2 + $0x68] sm:$0xff] %vm54, %v42
    %68 = vst.msk [vmem:[#allocation2 + $0x70] sm:$0xff] %vm54, %v43
    %69 = vst.msk [vmem:[#allocation2 + $0x78] sm:$0xff] %vm54, %v44
    %70 = vst.msk [vmem:[#allocation2 + $0x80] sm:$0xff] %vm54, %v45
    %71 = vst.msk [vmem:[#allocation2 + $0x88] sm:$0xff] %vm54, %v46
    %72 = vst.msk [vmem:[#allocation2 + $0x90] sm:$0xff] %vm54, %v47
    %73 = vst.msk [vmem:[#allocation2 + $0x98] sm:$0xff] %vm54, %v48
    %74 = vst.msk [vmem:[#allocation2 + $0xa0] sm:$0xff] %vm54, %v49
    %75 = vst.msk [vmem:[#allocation2 + $0xa8] sm:$0xff] %vm54, %v50
    %76 = vst.msk [vmem:[#allocation2 + $0xb0] sm:$0xff] %vm54, %v51
    %77 = vst.msk [vmem:[#allocation2 + $0xb8] sm:$0xff] %vm54, %v52
    %78 = vst.msk [vmem:[#allocation2 + $0xc0] sm:$0xff] %vm54, %v53
    %v79 = vlaneseq
    %v80 = vshrl.u32 %v79, 7
    %v81 = vadd.s32 %v80, 8
    %v82 = vadd.s32 %v80, 16
    %v83 = vld [vmem:[#allocation2 + $0x7] sm:$0xff]
    %v84 = vld [vmem:[#allocation2 + $0xf] sm:$0xff]
    %v85 = vld [vmem:[#allocation2 + $0x17] sm:$0xff]
    %v86 = vld [vmem:[#allocation2 + $0x1f] sm:$0xff]
    %v87 = vld [vmem:[#allocation2 + $0x27] sm:$0xff]
    %v88 = vld [vmem:[#allocation2 + $0x2f] sm:$0xff]
    %v89 = vld [vmem:[#allocation2 + $0x37] sm:$0xff]
    %v90 = vld [vmem:[#allocation2 + $0x3f] sm:$0xff]
    %v91 = vld [vmem:[#allocation2 + $0x47] sm:$0xff]
    %v92 = vld [vmem:[#allocation2 + $0x4f] sm:$0xff]
    %v93 = vld [vmem:[#allocation2 + $0x57] sm:$0xff]
    %v94 = vld [vmem:[#allocation2 + $0x5f] sm:$0xff]
    %v95 = vld [vmem:[#allocation2 + $0x67] sm:$0xff]
    %v96 = vld [vmem:[#allocation2 + $0x6f] sm:$0xff]
    %v97 = vld [vmem:[#allocation2 + $0x77] sm:$0xff]
    %v98 = vld [vmem:[#allocation2 + $0x7f] sm:$0xff]
    %v99 = vld [vmem:[#allocation2 + $0x87] sm:$0xff]
    %v100 = vld [vmem:[#allocation2 + $0x8f] sm:$0xff]
    %v101 = vld [vmem:[#allocation2 + $0x97] sm:$0xff]
    %v102 = vld [vmem:[#allocation2 + $0x9f] sm:$0xff]
    %v103 = vld [vmem:[#allocation2 + $0xa7] sm:$0xff]
    %v104 = vld [vmem:[#allocation2 + $0xaf] sm:$0xff]
    %v105 = vld [vmem:[#allocation2 + $0xb7] sm:$0xff]
    %v106 = vld [vmem:[#allocation2 + $0xbf] sm:$0xff]
    %v107 = vld [vmem:[#allocation3] sm:$0xff]
    %v108 = vld [vmem:[#allocation3 + $0x8] sm:$0xff]
    %v109 = vld [vmem:[#allocation3 + $0x10] sm:$0xff]
    %v110 = vld [vmem:[#allocation3 + $0x18] sm:$0xff]
    %v111 = vld [vmem:[#allocation2 + $0x8] sm:$0xff]
    %v112 = vld [vmem:[#allocation2 + $0x10] sm:$0xff]
    %v113 = vld [vmem:[#allocation2 + $0x18] sm:$0xff]
    %v114 = vld [vmem:[#allocation2 + $0x20] sm:$0xff]
    %v115 = vld [vmem:[#allocation2 + $0x28] sm:$0xff]
    %v116 = vld [vmem:[#allocation2 + $0x30] sm:$0xff]
    %v117 = vld [vmem:[#allocation2 + $0x38] sm:$0xff]
    %v118 = vld [vmem:[#allocation2 + $0x40] sm:$0xff]
    %v119 = vld [vmem:[#allocation2 + $0x48] sm:$0xff]
    %v120 = vld [vmem:[#allocation2 + $0x50] sm:$0xff]
    %v121 = vld [vmem:[#allocation2 + $0x58] sm:$0xff]
    %v122 = vld [vmem:[#allocation2 + $0x60] sm:$0xff]
    %v123 = vld [vmem:[#allocation2 + $0x68] sm:$0xff]
    %v124 = vld [vmem:[#allocation2 + $0x70] sm:$0xff]
    %v125 = vld [vmem:[#allocation2 + $0x78] sm:$0xff]
    %v126 = vld [vmem:[#allocation2 + $0x80] sm:$0xff]
    %v127 = vld [vmem:[#allocation2 + $0x88] sm:$0xff]
    %v128 = vld [vmem:[#allocation2 + $0x90] sm:$0xff]
    %v129 = vld [vmem:[#allocation2 + $0x98] sm:$0xff]
    %v130 = vld [vmem:[#allocation2 + $0xa0] sm:$0xff]
    %v131 = vld [vmem:[#allocation2 + $0xa8] sm:$0xff]
    %v132 = vld [vmem:[#allocation2 + $0xb0] sm:$0xff]
    %v133 = vld [vmem:[#allocation2 + $0xb8] sm:$0xff]
    %v134 = vld [vmem:[#allocation2 + $0xc0] sm:$0xff]
    %s135 = scalar_lea.vmem [#allocation3], 32
    %v136 = vld [vmem:[%s135] sm:$0xff]
    %v137 = vld [vmem:[%s135 + $0x8] sm:$0xff]
    %v138 = vld [vmem:[%s135 + $0x10] sm:$0xff]
    %v139 = vld [vmem:[%s135 + $0x18] sm:$0xff]
    %v141 = vsel %vm54, %v111, 0
    %v144 = vsel %vm54, %v112, 0
    %v147 = vsel %vm54, %v113, 0
    %v150 = vsel %vm54, %v114, 0
    %v153 = vsel %vm54, %v115, 0
    %v156 = vsel %vm54, %v116, 0
    %v159 = vsel %vm54, %v117, 0
    %v162 = vsel %vm54, %v118, 0
    %v165 = vsel %vm54, %v119, 0
    %v168 = vsel %vm54, %v120, 0
    %v171 = vsel %vm54, %v121, 0
    %v174 = vsel %vm54, %v122, 0
    %v177 = vsel %vm54, %v123, 0
    %v180 = vsel %vm54, %v124, 0
    %v183 = vsel %vm54, %v125, 0
    %v186 = vsel %vm54, %v126, 0
    %v189 = vsel %vm54, %v127, 0
    %v192 = vsel %vm54, %v128, 0
    %v195 = vsel %vm54, %v129, 0
    %v198 = vsel %vm54, %v130, 0
    %v201 = vsel %vm54, %v131, 0
    %v204 = vsel %vm54, %v132, 0
    %v207 = vsel %vm54, %v133, 0
    %v210 = vsel %vm54, %v134, 0
    %212 = vmatprep.subr.mxu0 0.0
    %213 = vmatpush1.msra.mxu0 0.0
    %214 = vmatprep.subr.mxu0 0.0
    %215 = vmatpush1.msra.mxu0 0.0
    %216 = vmatprep.subr.mxu0 0.0
    %217 = vmatpush1.msra.mxu0 0.0
    %218 = vmatprep.subr.mxu0 0.0
    %219 = vmatpush1.msra.mxu0 0.0
    %220 = vmatprep.subr.mxu0 0.0
    %221 = vmatpush1.msra.mxu0 0.0
    %222 = vmatprep.subr.mxu0 0.0
    %223 = vmatpush1.msra.mxu0 0.0
    %224 = vmatprep.subr.mxu0 0.0
    %225 = vmatpush1.msra.mxu0 0.0
    %226 = vmatprep.subr.mxu0 0.0
    %227 = vmatpush1.msra.mxu0 0.0
    %228 = vmatprep.subr.mxu0 0.0
    %229 = vmatpush1.msra.mxu0 0.0
    %230 = vmatprep.subr.mxu0 0.0
    %231 = vmatpush1.msra.mxu0 0.0
    %232 = vmatprep.subr.mxu0 0.0
    %233 = vmatpush1.msra.mxu0 0.0
    %234 = vmatprep.subr.mxu0 0.0
    %235 = vmatpush1.msra.mxu0 0.0
    %236 = vmatprep.subr.mxu0 0.0
    %237 = vmatpush1.msra.mxu0 %v139
    %238 = vmatprep.subr.mxu0 0.0
    %239 = vmatpush1.msra.mxu0 %v138
    %240 = vmatprep.subr.mxu0 0.0
    %241 = vmatpush1.msra.mxu0 %v137
    %242 = vmatprep.subr.mxu0 0.0
    %243 = vmatpush1.msra.mxu0 %v136
    %244 = vmatprep.subr.mxu0 0.0
    %245 = vmatpush2.msra.mxu0 0.0
    %246 = vmatprep.subr.mxu0 0.0
    %247 = vmatpush2.msra.mxu0 0.0
    %248 = vmatprep.subr.mxu0 0.0
    %249 = vmatpush2.msra.mxu0 0.0
    %250 = vmatprep.subr.mxu0 0.0
    %251 = vmatpush2.msra.mxu0 0.0
    %252 = vmatprep.subr.mxu0 0.0
    %253 = vmatpush2.msra.mxu0 0.0
    %254 = vmatprep.subr.mxu0 0.0
    %255 = vmatpush2.msra.mxu0 0.0
    %256 = vmatprep.subr.mxu0 0.0
    %257 = vmatpush2.msra.mxu0 0.0
    %258 = vmatprep.subr.mxu0 0.0
    %259 = vmatpush2.msra.mxu0 0.0
    %260 = vmatprep.subr.mxu0 0.0
    %261 = vmatpush2.msra.mxu0 0.0
    %262 = vmatprep.subr.mxu0 0.0
    %263 = vmatpush2.msra.mxu0 0.0
    %264 = vmatprep.subr.mxu0 0.0
    %265 = vmatpush2.msra.mxu0 0.0
    %266 = vmatprep.subr.mxu0 0.0
    %267 = vmatpush2.msra.mxu0 0.0
    %268 = vmatprep.subr.mxu0 0.0
    %269 = vmatpush2.msra.mxu0 0.0
    %270 = vmatprep.subr.mxu0 0.0
    %271 = vmatpush2.msra.mxu0 0.0
    %272 = vmatprep.subr.mxu0 0.0
    %273 = vmatpush2.msra.mxu0 0.0
    %274 = vmatprep.subr.mxu0 0.0
    %275 = vmatpush2.msra.mxu0 0.0
    %276 = vmatprep.mubr.f32.mxu0 0.0
    %277 = vmatmul.mubr.f32.gmra.mxu0 %v141
    %v278 = vpop.f32.mrf.mxu0
    %v279 = vadd.f32 0.0, %v278
    %v280 = vpop.f32.mrf.mxu0
    %281 = vmatprep.mubr.f32.mxu0 0.0
    %282 = vmatmul.mubr.f32.gmra.mxu0 %v144
    %v283 = vpop.f32.mrf.mxu0
    %v284 = vadd.f32 0.0, %v283
    %v285 = vpop.f32.mrf.mxu0
    %286 = vmatprep.mubr.f32.mxu0 0.0
    %287 = vmatmul.mubr.f32.gmra.mxu0 %v147
    %v288 = vpop.f32.mrf.mxu0
    %v289 = vadd.f32 0.0, %v288
    %v290 = vpop.f32.mrf.mxu0
    %291 = vmatprep.mubr.f32.mxu0 0.0
    %292 = vmatmul.mubr.f32.gmra.mxu0 %v150
    %v293 = vpop.f32.mrf.mxu0
    %v294 = vadd.f32 0.0, %v293
    %v295 = vpop.f32.mrf.mxu0
    %296 = vmatprep.mubr.f32.mxu0 0.0
    %297 = vmatmul.mubr.f32.gmra.mxu0 %v153
    %v298 = vpop.f32.mrf.mxu0
    %v299 = vadd.f32 0.0, %v298
    %v300 = vpop.f32.mrf.mxu0
    %301 = vmatprep.mubr.f32.mxu0 0.0
    %302 = vmatmul.mubr.f32.gmra.mxu0 %v156
    %v303 = vpop.f32.mrf.mxu0
    %v304 = vadd.f32 0.0, %v303
    %v305 = vpop.f32.mrf.mxu0
    %306 = vmatprep.mubr.f32.mxu0 0.0
    %307 = vmatmul.mubr.f32.gmra.mxu0 %v159
    %v308 = vpop.f32.mrf.mxu0
    %v309 = vadd.f32 0.0, %v308
    %v310 = vpop.f32.mrf.mxu0
    %311 = vmatprep.mubr.f32.mxu0 0.0
    %312 = vmatmul.mubr.f32.gmra.mxu0 %v162
    %v313 = vpop.f32.mrf.mxu0
    %v314 = vadd.f32 0.0, %v313
    %v315 = vpop.f32.mrf.mxu0
    %316 = vmatprep.mubr.f32.mxu0 0.0
    %317 = vmatmul.mubr.f32.gmra.mxu0 %v165
    %v318 = vpop.f32.mrf.mxu0
    %v319 = vadd.f32 0.0, %v318
    %v320 = vpop.f32.mrf.mxu0
    %321 = vmatprep.mubr.f32.mxu0 0.0
    %322 = vmatmul.mubr.f32.gmra.mxu0 %v168
    %v323 = vpop.f32.mrf.mxu0
    %v324 = vadd.f32 0.0, %v323
    %v325 = vpop.f32.mrf.mxu0
    %326 = vmatprep.mubr.f32.mxu0 0.0
    %327 = vmatmul.mubr.f32.gmra.mxu0 %v171
    %v328 = vpop.f32.mrf.mxu0
    %v329 = vadd.f32 0.0, %v328
    %v330 = vpop.f32.mrf.mxu0
    %331 = vmatprep.mubr.f32.mxu0 0.0
    %332 = vmatmul.mubr.f32.gmra.mxu0 %v174
    %v333 = vpop.f32.mrf.mxu0
    %v334 = vadd.f32 0.0, %v333
    %v335 = vpop.f32.mrf.mxu0
    %336 = vmatprep.mubr.f32.mxu0 0.0
    %337 = vmatmul.mubr.f32.gmra.mxu0 %v177
    %v338 = vpop.f32.mrf.mxu0
    %v339 = vadd.f32 0.0, %v338
    %v340 = vpop.f32.mrf.mxu0
    %341 = vmatprep.mubr.f32.mxu0 0.0
    %342 = vmatmul.mubr.f32.gmra.mxu0 %v180
    %v343 = vpop.f32.mrf.mxu0
    %v344 = vadd.f32 0.0, %v343
    %v345 = vpop.f32.mrf.mxu0
    %346 = vmatprep.mubr.f32.mxu0 0.0
    %347 = vmatmul.mubr.f32.gmra.mxu0 %v183
    %v348 = vpop.f32.mrf.mxu0
    %v349 = vadd.f32 0.0, %v348
    %v350 = vpop.f32.mrf.mxu0
    %351 = vmatprep.mubr.f32.mxu0 0.0
    %352 = vmatmul.mubr.f32.gmra.mxu0 %v186
    %v353 = vpop.f32.mrf.mxu0
    %v354 = vadd.f32 0.0, %v353
    %v355 = vpop.f32.mrf.mxu0
    %356 = vmatprep.mubr.f32.mxu0 0.0
    %357 = vmatmul.mubr.f32.gmra.mxu0 %v189
    %v358 = vpop.f32.mrf.mxu0
    %v359 = vadd.f32 0.0, %v358
    %v360 = vpop.f32.mrf.mxu0
    %361 = vmatprep.mubr.f32.mxu0 0.0
    %362 = vmatmul.mubr.f32.gmra.mxu0 %v192
    %v363 = vpop.f32.mrf.mxu0
    %v364 = vadd.f32 0.0, %v363
    %v365 = vpop.f32.mrf.mxu0
    %366 = vmatprep.mubr.f32.mxu0 0.0
    %367 = vmatmul.mubr.f32.gmra.mxu0 %v195
    %v368 = vpop.f32.mrf.mxu0
    %v369 = vadd.f32 0.0, %v368
    %v370 = vpop.f32.mrf.mxu0
    %371 = vmatprep.mubr.f32.mxu0 0.0
    %372 = vmatmul.mubr.f32.gmra.mxu0 %v198
    %v373 = vpop.f32.mrf.mxu0
    %v374 = vadd.f32 0.0, %v373
    %v375 = vpop.f32.mrf.mxu0
    %376 = vmatprep.mubr.f32.mxu0 0.0
    %377 = vmatmul.mubr.f32.gmra.mxu0 %v201
    %v378 = vpop.f32.mrf.mxu0
    %v379 = vadd.f32 0.0, %v378
    %v380 = vpop.f32.mrf.mxu0
    %381 = vmatprep.mubr.f32.mxu0 0.0
    %382 = vmatmul.mubr.f32.gmra.mxu0 %v204
    %v383 = vpop.f32.mrf.mxu0
    %v384 = vadd.f32 0.0, %v383
    %v385 = vpop.f32.mrf.mxu0
    %386 = vmatprep.mubr.f32.mxu0 0.0
    %387 = vmatmul.mubr.f32.gmra.mxu0 %v207
    %v388 = vpop.f32.mrf.mxu0
    %v389 = vadd.f32 0.0, %v388
    %v390 = vpop.f32.mrf.mxu0
    %391 = vmatprep.mubr.f32.mxu0 0.0
    %392 = vmatmul.mubr.f32.gmra.mxu0 %v210
    %v393 = vpop.f32.mrf.mxu0
    %v394 = vadd.f32 0.0, %v393
    %v395 = vpop.f32.mrf.mxu0
    %396 = vdwg.mxu0
    %v398 = vsel %vm54, %v83, 0
    %v401 = vsel %vm54, %v84, 0
    %v404 = vsel %vm54, %v85, 0
    %v407 = vsel %vm54, %v86, 0
    %v410 = vsel %vm54, %v87, 0
    %v413 = vsel %vm54, %v88, 0
    %v416 = vsel %vm54, %v89, 0
    %v419 = vsel %vm54, %v90, 0
    %v422 = vsel %vm54, %v91, 0
    %v425 = vsel %vm54, %v92, 0
    %v428 = vsel %vm54, %v93, 0
    %v431 = vsel %vm54, %v94, 0
    %v434 = vsel %vm54, %v95, 0
    %v437 = vsel %vm54, %v96, 0
    %v440 = vsel %vm54, %v97, 0
    %v443 = vsel %vm54, %v98, 0
    %v446 = vsel %vm54, %v99, 0
    %v449 = vsel %vm54, %v100, 0
    %v452 = vsel %vm54, %v101, 0
    %v455 = vsel %vm54, %v102, 0
    %v458 = vsel %vm54, %v103, 0
    %v461 = vsel %vm54, %v104, 0
    %v464 = vsel %vm54, %v105, 0
    %v467 = vsel %vm54, %v106, 0
    %469 = vmatprep.subr.mxu0 0.0
    %470 = vmatpush1.msra.mxu0 0.0
    %471 = vmatprep.subr.mxu0 0.0
    %472 = vmatpush1.msra.mxu0 0.0
    %473 = vmatprep.subr.mxu0 0.0
    %474 = vmatpush1.msra.mxu0 0.0
    %475 = vmatprep.subr.mxu0 0.0
    %476 = vmatpush1.msra.mxu0 0.0
    %477 = vmatprep.subr.mxu0 0.0
    %478 = vmatpush1.msra.mxu0 0.0
    %479 = vmatprep.subr.mxu0 0.0
    %480 = vmatpush1.msra.mxu0 0.0
    %481 = vmatprep.subr.mxu0 0.0
    %482 = vmatpush1.msra.mxu0 0.0
    %483 = vmatprep.subr.mxu0 0.0
    %484 = vmatpush1.msra.mxu0 0.0
    %485 = vmatprep.subr.mxu0 0.0
    %486 = vmatpush1.msra.mxu0 0.0
    %487 = vmatprep.subr.mxu0 0.0
    %488 = vmatpush1.msra.mxu0 0.0
    %489 = vmatprep.subr.mxu0 0.0
    %490 = vmatpush1.msra.mxu0 0.0
    %491 = vmatprep.subr.mxu0 0.0
    %492 = vmatpush1.msra.mxu0 0.0
    %493 = vmatprep.subr.mxu0 0.0
    %494 = vmatpush1.msra.mxu0 %v110
    %495 = vmatprep.subr.mxu0 0.0
    %496 = vmatpush1.msra.mxu0 %v109
    %497 = vmatprep.subr.mxu0 0.0
    %498 = vmatpush1.msra.mxu0 %v108
    %499 = vmatprep.subr.mxu0 0.0
    %500 = vmatpush1.msra.mxu0 %v107
    %501 = vmatprep.subr.mxu0 0.0
    %502 = vmatpush2.msra.mxu0 0.0
    %503 = vmatprep.subr.mxu0 0.0
    %504 = vmatpush2.msra.mxu0 0.0
    %505 = vmatprep.subr.mxu0 0.0
    %506 = vmatpush2.msra.mxu0 0.0
    %507 = vmatprep.subr.mxu0 0.0
    %508 = vmatpush2.msra.mxu0 0.0
    %509 = vmatprep.subr.mxu0 0.0
    %510 = vmatpush2.msra.mxu0 0.0
    %511 = vmatprep.subr.mxu0 0.0
    %512 = vmatpush2.msra.mxu0 0.0
    %513 = vmatprep.subr.mxu0 0.0
    %514 = vmatpush2.msra.mxu0 0.0
    %515 = vmatprep.subr.mxu0 0.0
    %516 = vmatpush2.msra.mxu0 0.0
    %517 = vmatprep.subr.mxu0 0.0
    %518 = vmatpush2.msra.mxu0 0.0
    %519 = vmatprep.subr.mxu0 0.0
    %520 = vmatpush2.msra.mxu0 0.0
    %521 = vmatprep.subr.mxu0 0.0
    %522 = vmatpush2.msra.mxu0 0.0
    %523 = vmatprep.subr.mxu0 0.0
    %524 = vmatpush2.msra.mxu0 0.0
    %525 = vmatprep.subr.mxu0 0.0
    %526 = vmatpush2.msra.mxu0 0.0
    %527 = vmatprep.subr.mxu0 0.0
    %528 = vmatpush2.msra.mxu0 0.0
    %529 = vmatprep.subr.mxu0 0.0
    %530 = vmatpush2.msra.mxu0 0.0
    %531 = vmatprep.subr.mxu0 0.0
    %532 = vmatpush2.msra.mxu0 0.0
    %533 = vmatprep.mubr.f32.mxu0 0.0
    %534 = vmatmul.mubr.f32.gmra.mxu0 %v398
    %v535 = vpop.f32.mrf.mxu0
    %v536 = vadd.f32 %v279, %v535
    %v537 = vpop.f32.mrf.mxu0
    %538 = vmatprep.mubr.f32.mxu0 0.0
    %539 = vmatmul.mubr.f32.gmra.mxu0 %v401
    %v540 = vpop.f32.mrf.mxu0
    %v541 = vadd.f32 %v284, %v540
    %v542 = vpop.f32.mrf.mxu0
    %543 = vmatprep.mubr.f32.mxu0 0.0
    %544 = vmatmul.mubr.f32.gmra.mxu0 %v404
    %v545 = vpop.f32.mrf.mxu0
    %v546 = vadd.f32 %v289, %v545
    %v547 = vpop.f32.mrf.mxu0
    %548 = vmatprep.mubr.f32.mxu0 0.0
    %549 = vmatmul.mubr.f32.gmra.mxu0 %v407
    %v550 = vpop.f32.mrf.mxu0
    %v551 = vadd.f32 %v294, %v550
    %v552 = vpop.f32.mrf.mxu0
    %553 = vmatprep.mubr.f32.mxu0 0.0
    %554 = vmatmul.mubr.f32.gmra.mxu0 %v410
    %v555 = vpop.f32.mrf.mxu0
    %v556 = vadd.f32 %v299, %v555
    %v557 = vpop.f32.mrf.mxu0
    %558 = vmatprep.mubr.f32.mxu0 0.0
    %559 = vmatmul.mubr.f32.gmra.mxu0 %v413
    %v560 = vpop.f32.mrf.mxu0
    %v561 = vadd.f32 %v304, %v560
    %v562 = vpop.f32.mrf.mxu0
    %563 = vmatprep.mubr.f32.mxu0 0.0
    %564 = vmatmul.mubr.f32.gmra.mxu0 %v416
    %v565 = vpop.f32.mrf.mxu0
    %v566 = vadd.f32 %v309, %v565
    %v567 = vpop.f32.mrf.mxu0
    %568 = vmatprep.mubr.f32.mxu0 0.0
    %569 = vmatmul.mubr.f32.gmra.mxu0 %v419
    %v570 = vpop.f32.mrf.mxu0
    %v571 = vadd.f32 %v314, %v570
    %v572 = vpop.f32.mrf.mxu0
    %573 = vmatprep.mubr.f32.mxu0 0.0
    %574 = vmatmul.mubr.f32.gmra.mxu0 %v422
    %v575 = vpop.f32.mrf.mxu0
    %v576 = vadd.f32 %v319, %v575
    %v577 = vpop.f32.mrf.mxu0
    %578 = vmatprep.mubr.f32.mxu0 0.0
    %579 = vmatmul.mubr.f32.gmra.mxu0 %v425
    %v580 = vpop.f32.mrf.mxu0
    %v581 = vadd.f32 %v324, %v580
    %v582 = vpop.f32.mrf.mxu0
    %583 = vmatprep.mubr.f32.mxu0 0.0
    %584 = vmatmul.mubr.f32.gmra.mxu0 %v428
    %v585 = vpop.f32.mrf.mxu0
    %v586 = vadd.f32 %v329, %v585
    %v587 = vpop.f32.mrf.mxu0
    %588 = vmatprep.mubr.f32.mxu0 0.0
    %589 = vmatmul.mubr.f32.gmra.mxu0 %v431
    %v590 = vpop.f32.mrf.mxu0
    %v591 = vadd.f32 %v334, %v590
    %v592 = vpop.f32.mrf.mxu0
    %593 = vmatprep.mubr.f32.mxu0 0.0
    %594 = vmatmul.mubr.f32.gmra.mxu0 %v434
    %v595 = vpop.f32.mrf.mxu0
    %v596 = vadd.f32 %v339, %v595
    %v597 = vpop.f32.mrf.mxu0
    %598 = vmatprep.mubr.f32.mxu0 0.0
    %599 = vmatmul.mubr.f32.gmra.mxu0 %v437
    %v600 = vpop.f32.mrf.mxu0
    %v601 = vadd.f32 %v344, %v600
    %v602 = vpop.f32.mrf.mxu0
    %603 = vmatprep.mubr.f32.mxu0 0.0
    %604 = vmatmul.mubr.f32.gmra.mxu0 %v440
    %v605 = vpop.f32.mrf.mxu0
    %v606 = vadd.f32 %v349, %v605
    %v607 = vpop.f32.mrf.mxu0
    %608 = vmatprep.mubr.f32.mxu0 0.0
    %609 = vmatmul.mubr.f32.gmra.mxu0 %v443
    %v610 = vpop.f32.mrf.mxu0
    %v611 = vadd.f32 %v354, %v610
    %v612 = vpop.f32.mrf.mxu0
    %613 = vmatprep.mubr.f32.mxu0 0.0
    %614 = vmatmul.mubr.f32.gmra.mxu0 %v446
    %v615 = vpop.f32.mrf.mxu0
    %v616 = vadd.f32 %v359, %v615
    %v617 = vpop.f32.mrf.mxu0
    %618 = vmatprep.mubr.f32.mxu0 0.0
    %619 = vmatmul.mubr.f32.gmra.mxu0 %v449
    %v620 = vpop.f32.mrf.mxu0
    %v621 = vadd.f32 %v364, %v620
    %v622 = vpop.f32.mrf.mxu0
    %623 = vmatprep.mubr.f32.mxu0 0.0
    %624 = vmatmul.mubr.f32.gmra.mxu0 %v452
    %v625 = vpop.f32.mrf.mxu0
    %v626 = vadd.f32 %v369, %v625
    %v627 = vpop.f32.mrf.mxu0
    %628 = vmatprep.mubr.f32.mxu0 0.0
    %629 = vmatmul.mubr.f32.gmra.mxu0 %v455
    %v630 = vpop.f32.mrf.mxu0
    %v631 = vadd.f32 %v374, %v630
    %v632 = vpop.f32.mrf.mxu0
    %633 = vmatprep.mubr.f32.mxu0 0.0
    %634 = vmatmul.mubr.f32.gmra.mxu0 %v458
    %v635 = vpop.f32.mrf.mxu0
    %v636 = vadd.f32 %v379, %v635
    %v637 = vpop.f32.mrf.mxu0
    %638 = vmatprep.mubr.f32.mxu0 0.0
    %639 = vmatmul.mubr.f32.gmra.mxu0 %v461
    %v640 = vpop.f32.mrf.mxu0
    %v641 = vadd.f32 %v384, %v640
    %v642 = vpop.f32.mrf.mxu0
    %643 = vmatprep.mubr.f32.mxu0 0.0
    %644 = vmatmul.mubr.f32.gmra.mxu0 %v464
    %v645 = vpop.f32.mrf.mxu0
    %v646 = vadd.f32 %v389, %v645
    %v647 = vpop.f32.mrf.mxu0
    %648 = vmatprep.mubr.f32.mxu0 0.0
    %649 = vmatmul.mubr.f32.gmra.mxu0 %v467
    %v650 = vpop.f32.mrf.mxu0
    %v651 = vadd.f32 %v394, %v650
    %v652 = vpop.f32.mrf.mxu0
    %653 = vdwg.mxu0
    %v654 = vld [vmem:[#allocation2 + $0x9] sm:$0xff]
    %v655 = vld [vmem:[#allocation2 + $0x11] sm:$0xff]
    %v656 = vld [vmem:[#allocation2 + $0x19] sm:$0xff]
    %v657 = vld [vmem:[#allocation2 + $0x21] sm:$0xff]
    %v658 = vld [vmem:[#allocation2 + $0x29] sm:$0xff]
    %v659 = vld [vmem:[#allocation2 + $0x31] sm:$0xff]
    %v660 = vld [vmem:[#allocation2 + $0x39] sm:$0xff]
    %v661 = vld [vmem:[#allocation2 + $0x41] sm:$0xff]
    %v662 = vld [vmem:[#allocation2 + $0x49] sm:$0xff]
    %v663 = vld [vmem:[#allocation2 + $0x51] sm:$0xff]
    %v664 = vld [vmem:[#allocation2 + $0x59] sm:$0xff]
    %v665 = vld [vmem:[#allocation2 + $0x61] sm:$0xff]
    %v666 = vld [vmem:[#allocation2 + $0x69] sm:$0xff]
    %v667 = vld [vmem:[#allocation2 + $0x71] sm:$0xff]
    %v668 = vld [vmem:[#allocation2 + $0x79] sm:$0xff]
    %v669 = vld [vmem:[#allocation2 + $0x81] sm:$0xff]
    %v670 = vld [vmem:[#allocation2 + $0x89] sm:$0xff]
    %v671 = vld [vmem:[#allocation2 + $0x91] sm:$0xff]
    %v672 = vld [vmem:[#allocation2 + $0x99] sm:$0xff]
    %v673 = vld [vmem:[#allocation2 + $0xa1] sm:$0xff]
    %v674 = vld [vmem:[#allocation2 + $0xa9] sm:$0xff]
    %v675 = vld [vmem:[#allocation2 + $0xb1] sm:$0xff]
    %v676 = vld [vmem:[#allocation2 + $0xb9] sm:$0xff]
    %v677 = vld [vmem:[#allocation2 + $0xc1] sm:$0xff]
    %s678 = scalar_lea.vmem [#allocation3], 64
    %v679 = vld [vmem:[%s678] sm:$0xff]
    %v680 = vld [vmem:[%s678 + $0x8] sm:$0xff]
    %v681 = vld [vmem:[%s678 + $0x10] sm:$0xff]
    %v682 = vld [vmem:[%s678 + $0x18] sm:$0xff]
    %v684 = vsel %vm54, %v654, 0
    %v687 = vsel %vm54, %v655, 0
    %v690 = vsel %vm54, %v656, 0
    %v693 = vsel %vm54, %v657, 0
    %v696 = vsel %vm54, %v658, 0
    %v699 = vsel %vm54, %v659, 0
    %v702 = vsel %vm54, %v660, 0
    %v705 = vsel %vm54, %v661, 0
    %v708 = vsel %vm54, %v662, 0
    %v711 = vsel %vm54, %v663, 0
    %v714 = vsel %vm54, %v664, 0
    %v717 = vsel %vm54, %v665, 0
    %v720 = vsel %vm54, %v666, 0
    %v723 = vsel %vm54, %v667, 0
    %v726 = vsel %vm54, %v668, 0
    %v729 = vsel %vm54, %v669, 0
    %v732 = vsel %vm54, %v670, 0
    %v735 = vsel %vm54, %v671, 0
    %v738 = vsel %vm54, %v672, 0
    %v741 = vsel %vm54, %v673, 0
    %v744 = vsel %vm54, %v674, 0
    %v747 = vsel %vm54, %v675, 0
    %v750 = vsel %vm54, %v676, 0
    %v753 = vsel %vm54, %v677, 0
    %755 = vmatprep.subr.mxu0 0.0
    %756 = vmatpush1.msra.mxu0 0.0
    %757 = vmatprep.subr.mxu0 0.0
    %758 = vmatpush1.msra.mxu0 0.0
    %759 = vmatprep.subr.mxu0 0.0
    %760 = vmatpush1.msra.mxu0 0.0
    %761 = vmatprep.subr.mxu0 0.0
    %762 = vmatpush1.msra.mxu0 0.0
    %763 = vmatprep.subr.mxu0 0.0
    %764 = vmatpush1.msra.mxu0 0.0
    %765 = vmatprep.subr.mxu0 0.0
    %766 = vmatpush1.msra.mxu0 0.0
    %767 = vmatprep.subr.mxu0 0.0
    %768 = vmatpush1.msra.mxu0 0.0
    %769 = vmatprep.subr.mxu0 0.0
    %770 = vmatpush1.msra.mxu0 0.0
    %771 = vmatprep.subr.mxu0 0.0
    %772 = vmatpush1.msra.mxu0 0.0
    %773 = vmatprep.subr.mxu0 0.0
    %774 = vmatpush1.msra.mxu0 0.0
    %775 = vmatprep.subr.mxu0 0.0
    %776 = vmatpush1.msra.mxu0 0.0
    %777 = vmatprep.subr.mxu0 0.0
    %778 = vmatpush1.msra.mxu0 0.0
    %779 = vmatprep.subr.mxu0 0.0
    %780 = vmatpush1.msra.mxu0 %v682
    %781 = vmatprep.subr.mxu0 0.0
    %782 = vmatpush1.msra.mxu0 %v681
    %783 = vmatprep.subr.mxu0 0.0
    %784 = vmatpush1.msra.mxu0 %v680
    %785 = vmatprep.subr.mxu0 0.0
    %786 = vmatpush1.msra.mxu0 %v679
    %787 = vmatprep.subr.mxu0 0.0
    %788 = vmatpush2.msra.mxu0 0.0
    %789 = vmatprep.subr.mxu0 0.0
    %790 = vmatpush2.msra.mxu0 0.0
    %791 = vmatprep.subr.mxu0 0.0
    %792 = vmatpush2.msra.mxu0 0.0
    %793 = vmatprep.subr.mxu0 0.0
    %794 = vmatpush2.msra.mxu0 0.0
    %795 = vmatprep.subr.mxu0 0.0
    %796 = vmatpush2.msra.mxu0 0.0
    %797 = vmatprep.subr.mxu0 0.0
    %798 = vmatpush2.msra.mxu0 0.0
    %799 = vmatprep.subr.mxu0 0.0
    %800 = vmatpush2.msra.mxu0 0.0
    %801 = vmatprep.subr.mxu0 0.0
    %802 = vmatpush2.msra.mxu0 0.0
    %803 = vmatprep.subr.mxu0 0.0
    %804 = vmatpush2.msra.mxu0 0.0
    %805 = vmatprep.subr.mxu0 0.0
    %806 = vmatpush2.msra.mxu0 0.0
    %807 = vmatprep.subr.mxu0 0.0
    %808 = vmatpush2.msra.mxu0 0.0
    %809 = vmatprep.subr.mxu0 0.0
    %810 = vmatpush2.msra.mxu0 0.0
    %811 = vmatprep.subr.mxu0 0.0
    %812 = vmatpush2.msra.mxu0 0.0
    %813 = vmatprep.subr.mxu0 0.0
    %814 = vmatpush2.msra.mxu0 0.0
    %815 = vmatprep.subr.mxu0 0.0
    %816 = vmatpush2.msra.mxu0 0.0
    %817 = vmatprep.subr.mxu0 0.0
    %818 = vmatpush2.msra.mxu0 0.0
    %819 = vmatprep.mubr.f32.mxu0 0.0
    %820 = vmatmul.mubr.f32.gmra.mxu0 %v684
    %v821 = vpop.f32.mrf.mxu0
    %v822 = vadd.f32 0.0, %v821
    %v823 = vpop.f32.mrf.mxu0
    %824 = vmatprep.mubr.f32.mxu0 0.0
    %825 = vmatmul.mubr.f32.gmra.mxu0 %v687
    %v826 = vpop.f32.mrf.mxu0
    %v827 = vadd.f32 0.0, %v826
    %v828 = vpop.f32.mrf.mxu0
    %829 = vmatprep.mubr.f32.mxu0 0.0
    %830 = vmatmul.mubr.f32.gmra.mxu0 %v690
    %v831 = vpop.f32.mrf.mxu0
    %v832 = vadd.f32 0.0, %v831
    %v833 = vpop.f32.mrf.mxu0
    %834 = vmatprep.mubr.f32.mxu0 0.0
    %835 = vmatmul.mubr.f32.gmra.mxu0 %v693
    %v836 = vpop.f32.mrf.mxu0
    %v837 = vadd.f32 0.0, %v836
    %v838 = vpop.f32.mrf.mxu0
    %839 = vmatprep.mubr.f32.mxu0 0.0
    %840 = vmatmul.mubr.f32.gmra.mxu0 %v696
    %v841 = vpop.f32.mrf.mxu0
    %v842 = vadd.f32 0.0, %v841
    %v843 = vpop.f32.mrf.mxu0
    %844 = vmatprep.mubr.f32.mxu0 0.0
    %845 = vmatmul.mubr.f32.gmra.mxu0 %v699
    %v846 = vpop.f32.mrf.mxu0
    %v847 = vadd.f32 0.0, %v846
    %v848 = vpop.f32.mrf.mxu0
    %849 = vmatprep.mubr.f32.mxu0 0.0
    %850 = vmatmul.mubr.f32.gmra.mxu0 %v702
    %v851 = vpop.f32.mrf.mxu0
    %v852 = vadd.f32 0.0, %v851
    %v853 = vpop.f32.mrf.mxu0
    %854 = vmatprep.mubr.f32.mxu0 0.0
    %855 = vmatmul.mubr.f32.gmra.mxu0 %v705
    %v856 = vpop.f32.mrf.mxu0
    %v857 = vadd.f32 0.0, %v856
    %v858 = vpop.f32.mrf.mxu0
    %859 = vmatprep.mubr.f32.mxu0 0.0
    %860 = vmatmul.mubr.f32.gmra.mxu0 %v708
    %v861 = vpop.f32.mrf.mxu0
    %v862 = vadd.f32 0.0, %v861
    %v863 = vpop.f32.mrf.mxu0
    %864 = vmatprep.mubr.f32.mxu0 0.0
    %865 = vmatmul.mubr.f32.gmra.mxu0 %v711
    %v866 = vpop.f32.mrf.mxu0
    %v867 = vadd.f32 0.0, %v866
    %v868 = vpop.f32.mrf.mxu0
    %869 = vmatprep.mubr.f32.mxu0 0.0
    %870 = vmatmul.mubr.f32.gmra.mxu0 %v714
    %v871 = vpop.f32.mrf.mxu0
    %v872 = vadd.f32 0.0, %v871
    %v873 = vpop.f32.mrf.mxu0
    %874 = vmatprep.mubr.f32.mxu0 0.0
    %875 = vmatmul.mubr.f32.gmra.mxu0 %v717
    %v876 = vpop.f32.mrf.mxu0
    %v877 = vadd.f32 0.0, %v876
    %v878 = vpop.f32.mrf.mxu0
    %879 = vmatprep.mubr.f32.mxu0 0.0
    %880 = vmatmul.mubr.f32.gmra.mxu0 %v720
    %v881 = vpop.f32.mrf.mxu0
    %v882 = vadd.f32 0.0, %v881
    %v883 = vpop.f32.mrf.mxu0
    %884 = vmatprep.mubr.f32.mxu0 0.0
    %885 = vmatmul.mubr.f32.gmra.mxu0 %v723
    %v886 = vpop.f32.mrf.mxu0
    %v887 = vadd.f32 0.0, %v886
    %v888 = vpop.f32.mrf.mxu0
    %889 = vmatprep.mubr.f32.mxu0 0.0
    %890 = vmatmul.mubr.f32.gmra.mxu0 %v726
    %v891 = vpop.f32.mrf.mxu0
    %v892 = vadd.f32 0.0, %v891
    %v893 = vpop.f32.mrf.mxu0
    %894 = vmatprep.mubr.f32.mxu0 0.0
    %895 = vmatmul.mubr.f32.gmra.mxu0 %v729
    %v896 = vpop.f32.mrf.mxu0
    %v897 = vadd.f32 0.0, %v896
    %v898 = vpop.f32.mrf.mxu0
    %899 = vmatprep.mubr.f32.mxu0 0.0
    %900 = vmatmul.mubr.f32.gmra.mxu0 %v732
    %v901 = vpop.f32.mrf.mxu0
    %v902 = vadd.f32 0.0, %v901
    %v903 = vpop.f32.mrf.mxu0
    %904 = vmatprep.mubr.f32.mxu0 0.0
    %905 = vmatmul.mubr.f32.gmra.mxu0 %v735
    %v906 = vpop.f32.mrf.mxu0
    %v907 = vadd.f32 0.0, %v906
    %v908 = vpop.f32.mrf.mxu0
    %909 = vmatprep.mubr.f32.mxu0 0.0
    %910 = vmatmul.mubr.f32.gmra.mxu0 %v738
    %v911 = vpop.f32.mrf.mxu0
    %v912 = vadd.f32 0.0, %v911
    %v913 = vpop.f32.mrf.mxu0
    %914 = vmatprep.mubr.f32.mxu0 0.0
    %915 = vmatmul.mubr.f32.gmra.mxu0 %v741
    %v916 = vpop.f32.mrf.mxu0
    %v917 = vadd.f32 0.0, %v916
    %v918 = vpop.f32.mrf.mxu0
    %919 = vmatprep.mubr.f32.mxu0 0.0
    %920 = vmatmul.mubr.f32.gmra.mxu0 %v744
    %v921 = vpop.f32.mrf.mxu0
    %v922 = vadd.f32 0.0, %v921
    %v923 = vpop.f32.mrf.mxu0
    %924 = vmatprep.mubr.f32.mxu0 0.0
    %925 = vmatmul.mubr.f32.gmra.mxu0 %v747
    %v926 = vpop.f32.mrf.mxu0
    %v927 = vadd.f32 0.0, %v926
    %v928 = vpop.f32.mrf.mxu0
    %929 = vmatprep.mubr.f32.mxu0 0.0
    %930 = vmatmul.mubr.f32.gmra.mxu0 %v750
    %v931 = vpop.f32.mrf.mxu0
    %v932 = vadd.f32 0.0, %v931
    %v933 = vpop.f32.mrf.mxu0
    %934 = vmatprep.mubr.f32.mxu0 0.0
    %935 = vmatmul.mubr.f32.gmra.mxu0 %v753
    %v936 = vpop.f32.mrf.mxu0
    %v937 = vadd.f32 0.0, %v936
    %v938 = vpop.f32.mrf.mxu0
    %939 = vdwg.mxu0
    %v940 = vadd.f32 %v536, %v822
    %v941 = vadd.f32 %v541, %v827
    %v942 = vadd.f32 %v546, %v832
    %v943 = vadd.f32 %v551, %v837
    %v944 = vadd.f32 %v556, %v842
    %v945 = vadd.f32 %v561, %v847
    %v946 = vadd.f32 %v566, %v852
    %v947 = vadd.f32 %v571, %v857
    %v948 = vadd.f32 %v576, %v862
    %v949 = vadd.f32 %v581, %v867
    %v950 = vadd.f32 %v586, %v872
    %v951 = vadd.f32 %v591, %v877
    %v952 = vadd.f32 %v596, %v882
    %v953 = vadd.f32 %v601, %v887
    %v954 = vadd.f32 %v606, %v892
    %v955 = vadd.f32 %v611, %v897
    %v956 = vadd.f32 %v616, %v902
    %v957 = vadd.f32 %v621, %v907
    %v958 = vadd.f32 %v626, %v912
    %v959 = vadd.f32 %v631, %v917
    %v960 = vadd.f32 %v636, %v922
    %v961 = vadd.f32 %v641, %v927
    %v962 = vadd.f32 %v646, %v932
    %v963 = vadd.f32 %v651, %v937
    %v964 = vld [vmem:[%s2] sm:$0x1]
    %v966 = vlaneseq
    %v967 = vshrl.u32 %v966, 7
    %v968 = vsub.s32 0, %v967
    %v969 = vrot.slane %v964, %v968
    %v971 = vadd.f32 %v940, %v969
    %v972 = vadd.f32 %v941, %v969
    %v973 = vadd.f32 %v942, %v969
    %v974 = vadd.f32 %v943, %v969
    %v975 = vadd.f32 %v944, %v969
    %v976 = vadd.f32 %v945, %v969
    %v977 = vadd.f32 %v946, %v969
    %v978 = vadd.f32 %v947, %v969
    %v979 = vadd.f32 %v948, %v969
    %v980 = vadd.f32 %v949, %v969
    %v981 = vadd.f32 %v950, %v969
    %v982 = vadd.f32 %v951, %v969
    %v983 = vadd.f32 %v952, %v969
    %v984 = vadd.f32 %v953, %v969
    %v985 = vadd.f32 %v954, %v969
    %v986 = vadd.f32 %v955, %v969
    %v987 = vadd.f32 %v956, %v969
    %v988 = vadd.f32 %v957, %v969
    %v989 = vadd.f32 %v958, %v969
    %v990 = vadd.f32 %v959, %v969
    %v991 = vadd.f32 %v960, %v969
    %v992 = vadd.f32 %v961, %v969
    %v993 = vadd.f32 %v962, %v969
    %v994 = vadd.f32 %v963, %v969
    %v995 = vmax.f32 %v971, 0.0
    %v996 = vmax.f32 %v972, 0.0
    %v997 = vmax.f32 %v973, 0.0
    %v998 = vmax.f32 %v974, 0.0
    %v999 = vmax.f32 %v975, 0.0
    %v1000 = vmax.f32 %v976, 0.0
    %v1001 = vmax.f32 %v977, 0.0
    %v1002 = vmax.f32 %v978, 0.0
    %v1003 = vmax.f32 %v979, 0.0
    %v1004 = vmax.f32 %v980, 0.0
    %v1005 = vmax.f32 %v981, 0.0
    %v1006 = vmax.f32 %v982, 0.0
    %v1007 = vmax.f32 %v983, 0.0
    %v1008 = vmax.f32 %v984, 0.0
    %v1009 = vmax.f32 %v985, 0.0
    %v1010 = vmax.f32 %v986, 0.0
    %v1011 = vmax.f32 %v987, 0.0
    %v1012 = vmax.f32 %v988, 0.0
    %v1013 = vmax.f32 %v989, 0.0
    %v1014 = vmax.f32 %v990, 0.0
    %v1015 = vmax.f32 %v991, 0.0
    %v1016 = vmax.f32 %v992, 0.0
    %v1017 = vmax.f32 %v993, 0.0
    %v1018 = vmax.f32 %v994, 0.0
    %vm1019 = vcmp.lt.s32.totalorder %v80, 16
    %vm1020 = vcmp.lt.s32.totalorder %v81, 16
    %vm1021 = vcmp.lt.s32.totalorder %v82, 16
    %v1022 = vsel %vm1019, 1, 0
    %v1023 = vsel %vm1020, 1, 0
    %v1024 = vsel %vm1021, 1, 0
    %vm1025 = vcmp.eq.s32.totalorder %v1022, 1
    %vm1026 = vcmp.eq.s32.totalorder %v1023, 1
    %vm1027 = vcmp.eq.s32.totalorder %v1024, 1
    %v1028 = vsel %vm1025, %v995, 0.0
    %v1029 = vsel %vm1026, %v996, 0.0
    %v1030 = vsel %vm1027, %v997, 0.0
    %v1031 = vsel %vm1025, %v998, 0.0
    %v1032 = vsel %vm1026, %v999, 0.0
    %v1033 = vsel %vm1027, %v1000, 0.0
    %v1034 = vsel %vm1025, %v1001, 0.0
    %v1035 = vsel %vm1026, %v1002, 0.0
    %v1036 = vsel %vm1027, %v1003, 0.0
    %v1037 = vsel %vm1025, %v1004, 0.0
    %v1038 = vsel %vm1026, %v1005, 0.0
    %v1039 = vsel %vm1027, %v1006, 0.0
    %v1040 = vsel %vm1025, %v1007, 0.0
    %v1041 = vsel %vm1026, %v1008, 0.0
    %v1042 = vsel %vm1027, %v1009, 0.0
    %v1043 = vsel %vm1025, %v1010, 0.0
    %v1044 = vsel %vm1026, %v1011, 0.0
    %v1045 = vsel %vm1027, %v1012, 0.0
    %v1046 = vsel %vm1025, %v1013, 0.0
    %v1047 = vsel %vm1026, %v1014, 0.0
    %v1048 = vsel %vm1027, %v1015, 0.0
    %v1049 = vsel %vm1025, %v1016, 0.0
    %v1050 = vsel %vm1026, %v1017, 0.0
    %v1051 = vsel %vm1027, %v1018, 0.0
    %1052 = vst [vmem:[#allocation2 + $0x8] sm:$0xff] %v1028
    %1053 = vst [vmem:[#allocation2 + $0x10] sm:$0xff] %v1029
    %1054 = vst [vmem:[#allocation2 + $0x18] sm:$0xff] %v1030
    %1055 = vst [vmem:[#allocation2 + $0x20] sm:$0xff] %v1031
    %1056 = vst [vmem:[#allocation2 + $0x28] sm:$0xff] %v1032
    %1057 = vst [vmem:[#allocation2 + $0x30] sm:$0xff] %v1033
    %1058 = vst [vmem:[#allocation2 + $0x38] sm:$0xff] %v1034
    %1059 = vst [vmem:[#allocation2 + $0x40] sm:$0xff] %v1035
    %1060 = vst [vmem:[#allocation2 + $0x48] sm:$0xff] %v1036
    %1061 = vst [vmem:[#allocation2 + $0x50] sm:$0xff] %v1037
    %1062 = vst [vmem:[#allocation2 + $0x58] sm:$0xff] %v1038
    %1063 = vst [vmem:[#allocation2 + $0x60] sm:$0xff] %v1039
    %1064 = vst [vmem:[#allocation2 + $0x68] sm:$0xff] %v1040
    %1065 = vst [vmem:[#allocation2 + $0x70] sm:$0xff] %v1041
    %1066 = vst [vmem:[#allocation2 + $0x78] sm:$0xff] %v1042
    %1067 = vst [vmem:[#allocation2 + $0x80] sm:$0xff] %v1043
    %1068 = vst [vmem:[#allocation2 + $0x88] sm:$0xff] %v1044
    %1069 = vst [vmem:[#allocation2 + $0x90] sm:$0xff] %v1045
    %1070 = vst [vmem:[#allocation2 + $0x98] sm:$0xff] %v1046
    %1071 = vst [vmem:[#allocation2 + $0xa0] sm:$0xff] %v1047
    %1072 = vst [vmem:[#allocation2 + $0xa8] sm:$0xff] %v1048
    %1073 = vst [vmem:[#allocation2 + $0xb0] sm:$0xff] %v1049
    %1074 = vst [vmem:[#allocation2 + $0xb8] sm:$0xff] %v1050
    %1075 = vst [vmem:[#allocation2 + $0xc0] sm:$0xff] %v1051
    %v1076 = vld [vmem:[#allocation2 + $0x7] sm:$0xff]
    %v1077 = vld [vmem:[#allocation2 + $0xf] sm:$0xff]
    %v1078 = vld [vmem:[#allocation2 + $0x17] sm:$0xff]
    %v1079 = vld [vmem:[#allocation2 + $0x1f] sm:$0xff]
    %v1080 = vld [vmem:[#allocation2 + $0x27] sm:$0xff]
    %v1081 = vld [vmem:[#allocation2 + $0x2f] sm:$0xff]
    %v1082 = vld [vmem:[#allocation2 + $0x37] sm:$0xff]
    %v1083 = vld [vmem:[#allocation2 + $0x3f] sm:$0xff]
    %v1084 = vld [vmem:[#allocation2 + $0x47] sm:$0xff]
    %v1085 = vld [vmem:[#allocation2 + $0x4f] sm:$0xff]
    %v1086 = vld [vmem:[#allocation2 + $0x57] sm:$0xff]
    %v1087 = vld [vmem:[#allocation2 + $0x5f] sm:$0xff]
    %v1088 = vld [vmem:[#allocation2 + $0x67] sm:$0xff]
    %v1089 = vld [vmem:[#allocation2 + $0x6f] sm:$0xff]
    %v1090 = vld [vmem:[#allocation2 + $0x77] sm:$0xff]
    %v1091 = vld [vmem:[#allocation2 + $0x7f] sm:$0xff]
    %v1092 = vld [vmem:[#allocation2 + $0x87] sm:$0xff]
    %v1093 = vld [vmem:[#allocation2 + $0x8f] sm:$0xff]
    %v1094 = vld [vmem:[#allocation2 + $0x97] sm:$0xff]
    %v1095 = vld [vmem:[#allocation2 + $0x9f] sm:$0xff]
    %v1096 = vld [vmem:[#allocation2 + $0xa7] sm:$0xff]
    %v1097 = vld [vmem:[#allocation2 + $0xaf] sm:$0xff]
    %v1098 = vld [vmem:[#allocation2 + $0xb7] sm:$0xff]
    %v1099 = vld [vmem:[#allocation2 + $0xbf] sm:$0xff]
    %s1100 = scalar_lea.vmem [#allocation3], 96
    %v1101 = vld [vmem:[%s1100] sm:$0xff]
    %v1102 = vld [vmem:[%s1100 + $0x8] sm:$0xff]
    %v1103 = vld [vmem:[%s1100 + $0x10] sm:$0xff]
    %v1104 = vld [vmem:[%s1100 + $0x18] sm:$0xff]
    %v1105 = vld [vmem:[#allocation2 + $0x8] sm:$0xff]
    %v1106 = vld [vmem:[#allocation2 + $0x10] sm:$0xff]
    %v1107 = vld [vmem:[#allocation2 + $0x18] sm:$0xff]
    %v1108 = vld [vmem:[#allocation2 + $0x20] sm:$0xff]
    %v1109 = vld [vmem:[#allocation2 + $0x28] sm:$0xff]
    %v1110 = vld [vmem:[#allocation2 + $0x30] sm:$0xff]
    %v1111 = vld [vmem:[#allocation2 + $0x38] sm:$0xff]
    %v1112 = vld [vmem:[#allocation2 + $0x40] sm:$0xff]
    %v1113 = vld [vmem:[#allocation2 + $0x48] sm:$0xff]
    %v1114 = vld [vmem:[#allocation2 + $0x50] sm:$0xff]
    %v1115 = vld [vmem:[#allocation2 + $0x58] sm:$0xff]
    %v1116 = vld [vmem:[#allocation2 + $0x60] sm:$0xff]
    %v1117 = vld [vmem:[#allocation2 + $0x68] sm:$0xff]
    %v1118 = vld [vmem:[#allocation2 + $0x70] sm:$0xff]
    %v1119 = vld [vmem:[#allocation2 + $0x78] sm:$0xff]
    %v1120 = vld [vmem:[#allocation2 + $0x80] sm:$0xff]
    %v1121 = vld [vmem:[#allocation2 + $0x88] sm:$0xff]
    %v1122 = vld [vmem:[#allocation2 + $0x90] sm:$0xff]
    %v1123 = vld [vmem:[#allocation2 + $0x98] sm:$0xff]
    %v1124 = vld [vmem:[#allocation2 + $0xa0] sm:$0xff]
    %v1125 = vld [vmem:[#allocation2 + $0xa8] sm:$0xff]
    %v1126 = vld [vmem:[#allocation2 + $0xb0] sm:$0xff]
    %v1127 = vld [vmem:[#allocation2 + $0xb8] sm:$0xff]
    %v1128 = vld [vmem:[#allocation2 + $0xc0] sm:$0xff]
    %s1129 = scalar_lea.vmem [#allocation3], 128
    %v1130 = vld [vmem:[%s1129] sm:$0xff]
    %v1131 = vld [vmem:[%s1129 + $0x8] sm:$0xff]
    %v1132 = vld [vmem:[%s1129 + $0x10] sm:$0xff]
    %v1133 = vld [vmem:[%s1129 + $0x18] sm:$0xff]
    %v1135 = vsel %vm54, %v1105, 0
    %v1138 = vsel %vm54, %v1106, 0
    %v1141 = vsel %vm54, %v1107, 0
    %v1144 = vsel %vm54, %v1108, 0
    %v1147 = vsel %vm54, %v1109, 0
    %v1150 = vsel %vm54, %v1110, 0
    %v1153 = vsel %vm54, %v1111, 0
    %v1156 = vsel %vm54, %v1112, 0
    %v1159 = vsel %vm54, %v1113, 0
    %v1162 = vsel %vm54, %v1114, 0
    %v1165 = vsel %vm54, %v1115, 0
    %v1168 = vsel %vm54, %v1116, 0
    %v1171 = vsel %vm54, %v1117, 0
    %v1174 = vsel %vm54, %v1118, 0
    %v1177 = vsel %vm54, %v1119, 0
    %v1180 = vsel %vm54, %v1120, 0
    %v1183 = vsel %vm54, %v1121, 0
    %v1186 = vsel %vm54, %v1122, 0
    %v1189 = vsel %vm54, %v1123, 0
    %v1192 = vsel %vm54, %v1124, 0
    %v1195 = vsel %vm54, %v1125, 0
    %v1198 = vsel %vm54, %v1126, 0
    %v1201 = vsel %vm54, %v1127, 0
    %v1204 = vsel %vm54, %v1128, 0
    %1206 = vmatprep.subr.mxu0 0.0
    %1207 = vmatpush1.msra.mxu0 0.0
    %1208 = vmatprep.subr.mxu0 0.0
    %1209 = vmatpush1.msra.mxu0 0.0
    %1210 = vmatprep.subr.mxu0 0.0
    %1211 = vmatpush1.msra.mxu0 0.0
    %1212 = vmatprep.subr.mxu0 0.0
    %1213 = vmatpush1.msra.mxu0 0.0
    %1214 = vmatprep.subr.mxu0 0.0
    %1215 = vmatpush1.msra.mxu0 0.0
    %1216 = vmatprep.subr.mxu0 0.0
    %1217 = vmatpush1.msra.mxu0 0.0
    %1218 = vmatprep.subr.mxu0 0.0
    %1219 = vmatpush1.msra.mxu0 0.0
    %1220 = vmatprep.subr.mxu0 0.0
    %1221 = vmatpush1.msra.mxu0 0.0
    %1222 = vmatprep.subr.mxu0 0.0
    %1223 = vmatpush1.msra.mxu0 0.0
    %1224 = vmatprep.subr.mxu0 0.0
    %1225 = vmatpush1.msra.mxu0 0.0
    %1226 = vmatprep.subr.mxu0 0.0
    %1227 = vmatpush1.msra.mxu0 0.0
    %1228 = vmatprep.subr.mxu0 0.0
    %1229 = vmatpush1.msra.mxu0 0.0
    %1230 = vmatprep.subr.mxu0 0.0
    %1231 = vmatpush1.msra.mxu0 %v1133
    %1232 = vmatprep.subr.mxu0 0.0
    %1233 = vmatpush1.msra.mxu0 %v1132
    %1234 = vmatprep.subr.mxu0 0.0
    %1235 = vmatpush1.msra.mxu0 %v1131
    %1236 = vmatprep.subr.mxu0 0.0
    %1237 = vmatpush1.msra.mxu0 %v1130
    %1238 = vmatprep.subr.mxu0 0.0
    %1239 = vmatpush2.msra.mxu0 0.0
    %1240 = vmatprep.subr.mxu0 0.0
    %1241 = vmatpush2.msra.mxu0 0.0
    %1242 = vmatprep.subr.mxu0 0.0
    %1243 = vmatpush2.msra.mxu0 0.0
    %1244 = vmatprep.subr.mxu0 0.0
    %1245 = vmatpush2.msra.mxu0 0.0
    %1246 = vmatprep.subr.mxu0 0.0
    %1247 = vmatpush2.msra.mxu0 0.0
    %1248 = vmatprep.subr.mxu0 0.0
    %1249 = vmatpush2.msra.mxu0 0.0
    %1250 = vmatprep.subr.mxu0 0.0
    %1251 = vmatpush2.msra.mxu0 0.0
    %1252 = vmatprep.subr.mxu0 0.0
    %1253 = vmatpush2.msra.mxu0 0.0
    %1254 = vmatprep.subr.mxu0 0.0
    %1255 = vmatpush2.msra.mxu0 0.0
    %1256 = vmatprep.subr.mxu0 0.0
    %1257 = vmatpush2.msra.mxu0 0.0
    %1258 = vmatprep.subr.mxu0 0.0
    %1259 = vmatpush2.msra.mxu0 0.0
    %1260 = vmatprep.subr.mxu0 0.0
    %1261 = vmatpush2.msra.mxu0 0.0
    %1262 = vmatprep.subr.mxu0 0.0
    %1263 = vmatpush2.msra.mxu0 0.0
    %1264 = vmatprep.subr.mxu0 0.0
    %1265 = vmatpush2.msra.mxu0 0.0
    %1266 = vmatprep.subr.mxu0 0.0
    %1267 = vmatpush2.msra.mxu0 0.0
    %1268 = vmatprep.subr.mxu0 0.0
    %1269 = vmatpush2.msra.mxu0 0.0
    %1270 = vmatprep.mubr.f32.mxu0 0.0
    %1271 = vmatmul.mubr.f32.gmra.mxu0 %v1135
    %v1272 = vpop.f32.mrf.mxu0
    %v1273 = vadd.f32 0.0, %v1272
    %v1274 = vpop.f32.mrf.mxu0
    %1275 = vmatprep.mubr.f32.mxu0 0.0
    %1276 = vmatmul.mubr.f32.gmra.mxu0 %v1138
    %v1277 = vpop.f32.mrf.mxu0
    %v1278 = vadd.f32 0.0, %v1277
    %v1279 = vpop.f32.mrf.mxu0
    %1280 = vmatprep.mubr.f32.mxu0 0.0
    %1281 = vmatmul.mubr.f32.gmra.mxu0 %v1141
    %v1282 = vpop.f32.mrf.mxu0
    %v1283 = vadd.f32 0.0, %v1282
    %v1284 = vpop.f32.mrf.mxu0
    %1285 = vmatprep.mubr.f32.mxu0 0.0
    %1286 = vmatmul.mubr.f32.gmra.mxu0 %v1144
    %v1287 = vpop.f32.mrf.mxu0
    %v1288 = vadd.f32 0.0, %v1287
    %v1289 = vpop.f32.mrf.mxu0
    %1290 = vmatprep.mubr.f32.mxu0 0.0
    %1291 = vmatmul.mubr.f32.gmra.mxu0 %v1147
    %v1292 = vpop.f32.mrf.mxu0
    %v1293 = vadd.f32 0.0, %v1292
    %v1294 = vpop.f32.mrf.mxu0
    %1295 = vmatprep.mubr.f32.mxu0 0.0
    %1296 = vmatmul.mubr.f32.gmra.mxu0 %v1150
    %v1297 = vpop.f32.mrf.mxu0
    %v1298 = vadd.f32 0.0, %v1297
    %v1299 = vpop.f32.mrf.mxu0
    %1300 = vmatprep.mubr.f32.mxu0 0.0
    %1301 = vmatmul.mubr.f32.gmra.mxu0 %v1153
    %v1302 = vpop.f32.mrf.mxu0
    %v1303 = vadd.f32 0.0, %v1302
    %v1304 = vpop.f32.mrf.mxu0
    %1305 = vmatprep.mubr.f32.mxu0 0.0
    %1306 = vmatmul.mubr.f32.gmra.mxu0 %v1156
    %v1307 = vpop.f32.mrf.mxu0
    %v1308 = vadd.f32 0.0, %v1307
    %v1309 = vpop.f32.mrf.mxu0
    %1310 = vmatprep.mubr.f32.mxu0 0.0
    %1311 = vmatmul.mubr.f32.gmra.mxu0 %v1159
    %v1312 = vpop.f32.mrf.mxu0
    %v1313 = vadd.f32 0.0, %v1312
    %v1314 = vpop.f32.mrf.mxu0
    %1315 = vmatprep.mubr.f32.mxu0 0.0
    %1316 = vmatmul.mubr.f32.gmra.mxu0 %v1162
    %v1317 = vpop.f32.mrf.mxu0
    %v1318 = vadd.f32 0.0, %v1317
    %v1319 = vpop.f32.mrf.mxu0
    %1320 = vmatprep.mubr.f32.mxu0 0.0
    %1321 = vmatmul.mubr.f32.gmra.mxu0 %v1165
    %v1322 = vpop.f32.mrf.mxu0
    %v1323 = vadd.f32 0.0, %v1322
    %v1324 = vpop.f32.mrf.mxu0
    %1325 = vmatprep.mubr.f32.mxu0 0.0
    %1326 = vmatmul.mubr.f32.gmra.mxu0 %v1168
    %v1327 = vpop.f32.mrf.mxu0
    %v1328 = vadd.f32 0.0, %v1327
    %v1329 = vpop.f32.mrf.mxu0
    %1330 = vmatprep.mubr.f32.mxu0 0.0
    %1331 = vmatmul.mubr.f32.gmra.mxu0 %v1171
    %v1332 = vpop.f32.mrf.mxu0
    %v1333 = vadd.f32 0.0, %v1332
    %v1334 = vpop.f32.mrf.mxu0
    %1335 = vmatprep.mubr.f32.mxu0 0.0
    %1336 = vmatmul.mubr.f32.gmra.mxu0 %v1174
    %v1337 = vpop.f32.mrf.mxu0
    %v1338 = vadd.f32 0.0, %v1337
    %v1339 = vpop.f32.mrf.mxu0
    %1340 = vmatprep.mubr.f32.mxu0 0.0
    %1341 = vmatmul.mubr.f32.gmra.mxu0 %v1177
    %v1342 = vpop.f32.mrf.mxu0
    %v1343 = vadd.f32 0.0, %v1342
    %v1344 = vpop.f32.mrf.mxu0
    %1345 = vmatprep.mubr.f32.mxu0 0.0
    %1346 = vmatmul.mubr.f32.gmra.mxu0 %v1180
    %v1347 = vpop.f32.mrf.mxu0
    %v1348 = vadd.f32 0.0, %v1347
    %v1349 = vpop.f32.mrf.mxu0
    %1350 = vmatprep.mubr.f32.mxu0 0.0
    %1351 = vmatmul.mubr.f32.gmra.mxu0 %v1183
    %v1352 = vpop.f32.mrf.mxu0
    %v1353 = vadd.f32 0.0, %v1352
    %v1354 = vpop.f32.mrf.mxu0
    %1355 = vmatprep.mubr.f32.mxu0 0.0
    %1356 = vmatmul.mubr.f32.gmra.mxu0 %v1186
    %v1357 = vpop.f32.mrf.mxu0
    %v1358 = vadd.f32 0.0, %v1357
    %v1359 = vpop.f32.mrf.mxu0
    %1360 = vmatprep.mubr.f32.mxu0 0.0
    %1361 = vmatmul.mubr.f32.gmra.mxu0 %v1189
    %v1362 = vpop.f32.mrf.mxu0
    %v1363 = vadd.f32 0.0, %v1362
    %v1364 = vpop.f32.mrf.mxu0
    %1365 = vmatprep.mubr.f32.mxu0 0.0
    %1366 = vmatmul.mubr.f32.gmra.mxu0 %v1192
    %v1367 = vpop.f32.mrf.mxu0
    %v1368 = vadd.f32 0.0, %v1367
    %v1369 = vpop.f32.mrf.mxu0
    %1370 = vmatprep.mubr.f32.mxu0 0.0
    %1371 = vmatmul.mubr.f32.gmra.mxu0 %v1195
    %v1372 = vpop.f32.mrf.mxu0
    %v1373 = vadd.f32 0.0, %v1372
    %v1374 = vpop.f32.mrf.mxu0
    %1375 = vmatprep.mubr.f32.mxu0 0.0
    %1376 = vmatmul.mubr.f32.gmra.mxu0 %v1198
    %v1377 = vpop.f32.mrf.mxu0
    %v1378 = vadd.f32 0.0, %v1377
    %v1379 = vpop.f32.mrf.mxu0
    %1380 = vmatprep.mubr.f32.mxu0 0.0
    %1381 = vmatmul.mubr.f32.gmra.mxu0 %v1201
    %v1382 = vpop.f32.mrf.mxu0
    %v1383 = vadd.f32 0.0, %v1382
    %v1384 = vpop.f32.mrf.mxu0
    %1385 = vmatprep.mubr.f32.mxu0 0.0
    %1386 = vmatmul.mubr.f32.gmra.mxu0 %v1204
    %v1387 = vpop.f32.mrf.mxu0
    %v1388 = vadd.f32 0.0, %v1387
    %v1389 = vpop.f32.mrf.mxu0
    %1390 = vdwg.mxu0
    %v1392 = vsel %vm54, %v1076, 0
    %v1395 = vsel %vm54, %v1077, 0
    %v1398 = vsel %vm54, %v1078, 0
    %v1401 = vsel %vm54, %v1079, 0
    %v1404 = vsel %vm54, %v1080, 0
    %v1407 = vsel %vm54, %v1081, 0
    %v1410 = vsel %vm54, %v1082, 0
    %v1413 = vsel %vm54, %v1083, 0
    %v1416 = vsel %vm54, %v1084, 0
    %v1419 = vsel %vm54, %v1085, 0
    %v1422 = vsel %vm54, %v1086, 0
    %v1425 = vsel %vm54, %v1087, 0
    %v1428 = vsel %vm54, %v1088, 0
    %v1431 = vsel %vm54, %v1089, 0
    %v1434 = vsel %vm54, %v1090, 0
    %v1437 = vsel %vm54, %v1091, 0
    %v1440 = vsel %vm54, %v1092, 0
    %v1443 = vsel %vm54, %v1093, 0
    %v1446 = vsel %vm54, %v1094, 0
    %v1449 = vsel %vm54, %v1095, 0
    %v1452 = vsel %vm54, %v1096, 0
    %v1455 = vsel %vm54, %v1097, 0
    %v1458 = vsel %vm54, %v1098, 0
    %v1461 = vsel %vm54, %v1099, 0
    %1463 = vmatprep.subr.mxu0 0.0
    %1464 = vmatpush1.msra.mxu0 0.0
    %1465 = vmatprep.subr.mxu0 0.0
    %1466 = vmatpush1.msra.mxu0 0.0
    %1467 = vmatprep.subr.mxu0 0.0
    %1468 = vmatpush1.msra.mxu0 0.0
    %1469 = vmatprep.subr.mxu0 0.0
    %1470 = vmatpush1.msra.mxu0 0.0
    %1471 = vmatprep.subr.mxu0 0.0
    %1472 = vmatpush1.msra.mxu0 0.0
    %1473 = vmatprep.subr.mxu0 0.0
    %1474 = vmatpush1.msra.mxu0 0.0
    %1475 = vmatprep.subr.mxu0 0.0
    %1476 = vmatpush1.msra.mxu0 0.0
    %1477 = vmatprep.subr.mxu0 0.0
    %1478 = vmatpush1.msra.mxu0 0.0
    %1479 = vmatprep.subr.mxu0 0.0
    %1480 = vmatpush1.msra.mxu0 0.0
    %1481 = vmatprep.subr.mxu0 0.0
    %1482 = vmatpush1.msra.mxu0 0.0
    %1483 = vmatprep.subr.mxu0 0.0
    %1484 = vmatpush1.msra.mxu0 0.0
    %1485 = vmatprep.subr.mxu0 0.0
    %1486 = vmatpush1.msra.mxu0 0.0
    %1487 = vmatprep.subr.mxu0 0.0
    %1488 = vmatpush1.msra.mxu0 %v1104
    %1489 = vmatprep.subr.mxu0 0.0
    %1490 = vmatpush1.msra.mxu0 %v1103
    %1491 = vmatprep.subr.mxu0 0.0
    %1492 = vmatpush1.msra.mxu0 %v1102
    %1493 = vmatprep.subr.mxu0 0.0
    %1494 = vmatpush1.msra.mxu0 %v1101
    %1495 = vmatprep.subr.mxu0 0.0
    %1496 = vmatpush2.msra.mxu0 0.0
    %1497 = vmatprep.subr.mxu0 0.0
    %1498 = vmatpush2.msra.mxu0 0.0
    %1499 = vmatprep.subr.mxu0 0.0
    %1500 = vmatpush2.msra.mxu0 0.0
    %1501 = vmatprep.subr.mxu0 0.0
    %1502 = vmatpush2.msra.mxu0 0.0
    %1503 = vmatprep.subr.mxu0 0.0
    %1504 = vmatpush2.msra.mxu0 0.0
    %1505 = vmatprep.subr.mxu0 0.0
    %1506 = vmatpush2.msra.mxu0 0.0
    %1507 = vmatprep.subr.mxu0 0.0
    %1508 = vmatpush2.msra.mxu0 0.0
    %1509 = vmatprep.subr.mxu0 0.0
    %1510 = vmatpush2.msra.mxu0 0.0
    %1511 = vmatprep.subr.mxu0 0.0
    %1512 = vmatpush2.msra.mxu0 0.0
    %1513 = vmatprep.subr.mxu0 0.0
    %1514 = vmatpush2.msra.mxu0 0.0
    %1515 = vmatprep.subr.mxu0 0.0
    %1516 = vmatpush2.msra.mxu0 0.0
    %1517 = vmatprep.subr.mxu0 0.0
    %1518 = vmatpush2.msra.mxu0 0.0
    %1519 = vmatprep.subr.mxu0 0.0
    %1520 = vmatpush2.msra.mxu0 0.0
    %1521 = vmatprep.subr.mxu0 0.0
    %1522 = vmatpush2.msra.mxu0 0.0
    %1523 = vmatprep.subr.mxu0 0.0
    %1524 = vmatpush2.msra.mxu0 0.0
    %1525 = vmatprep.subr.mxu0 0.0
    %1526 = vmatpush2.msra.mxu0 0.0
    %1527 = vmatprep.mubr.f32.mxu0 0.0
    %1528 = vmatmul.mubr.f32.gmra.mxu0 %v1392
    %v1529 = vpop.f32.mrf.mxu0
    %v1530 = vadd.f32 %v1273, %v1529
    %v1531 = vpop.f32.mrf.mxu0
    %1532 = vmatprep.mubr.f32.mxu0 0.0
    %1533 = vmatmul.mubr.f32.gmra.mxu0 %v1395
    %v1534 = vpop.f32.mrf.mxu0
    %v1535 = vadd.f32 %v1278, %v1534
    %v1536 = vpop.f32.mrf.mxu0
    %1537 = vmatprep.mubr.f32.mxu0 0.0
    %1538 = vmatmul.mubr.f32.gmra.mxu0 %v1398
    %v1539 = vpop.f32.mrf.mxu0
    %v1540 = vadd.f32 %v1283, %v1539
    %v1541 = vpop.f32.mrf.mxu0
    %1542 = vmatprep.mubr.f32.mxu0 0.0
    %1543 = vmatmul.mubr.f32.gmra.mxu0 %v1401
    %v1544 = vpop.f32.mrf.mxu0
    %v1545 = vadd.f32 %v1288, %v1544
    %v1546 = vpop.f32.mrf.mxu0
    %1547 = vmatprep.mubr.f32.mxu0 0.0
    %1548 = vmatmul.mubr.f32.gmra.mxu0 %v1404
    %v1549 = vpop.f32.mrf.mxu0
    %v1550 = vadd.f32 %v1293, %v1549
    %v1551 = vpop.f32.mrf.mxu0
    %1552 = vmatprep.mubr.f32.mxu0 0.0
    %1553 = vmatmul.mubr.f32.gmra.mxu0 %v1407
    %v1554 = vpop.f32.mrf.mxu0
    %v1555 = vadd.f32 %v1298, %v1554
    %v1556 = vpop.f32.mrf.mxu0
    %1557 = vmatprep.mubr.f32.mxu0 0.0
    %1558 = vmatmul.mubr.f32.gmra.mxu0 %v1410
    %v1559 = vpop.f32.mrf.mxu0
    %v1560 = vadd.f32 %v1303, %v1559
    %v1561 = vpop.f32.mrf.mxu0
    %1562 = vmatprep.mubr.f32.mxu0 0.0
    %1563 = vmatmul.mubr.f32.gmra.mxu0 %v1413
    %v1564 = vpop.f32.mrf.mxu0
    %v1565 = vadd.f32 %v1308, %v1564
    %v1566 = vpop.f32.mrf.mxu0
    %1567 = vmatprep.mubr.f32.mxu0 0.0
    %1568 = vmatmul.mubr.f32.gmra.mxu0 %v1416
    %v1569 = vpop.f32.mrf.mxu0
    %v1570 = vadd.f32 %v1313, %v1569
    %v1571 = vpop.f32.mrf.mxu0
    %1572 = vmatprep.mubr.f32.mxu0 0.0
    %1573 = vmatmul.mubr.f32.gmra.mxu0 %v1419
    %v1574 = vpop.f32.mrf.mxu0
    %v1575 = vadd.f32 %v1318, %v1574
    %v1576 = vpop.f32.mrf.mxu0
    %1577 = vmatprep.mubr.f32.mxu0 0.0
    %1578 = vmatmul.mubr.f32.gmra.mxu0 %v1422
    %v1579 = vpop.f32.mrf.mxu0
    %v1580 = vadd.f32 %v1323, %v1579
    %v1581 = vpop.f32.mrf.mxu0
    %1582 = vmatprep.mubr.f32.mxu0 0.0
    %1583 = vmatmul.mubr.f32.gmra.mxu0 %v1425
    %v1584 = vpop.f32.mrf.mxu0
    %v1585 = vadd.f32 %v1328, %v1584
    %v1586 = vpop.f32.mrf.mxu0
    %1587 = vmatprep.mubr.f32.mxu0 0.0
    %1588 = vmatmul.mubr.f32.gmra.mxu0 %v1428
    %v1589 = vpop.f32.mrf.mxu0
    %v1590 = vadd.f32 %v1333, %v1589
    %v1591 = vpop.f32.mrf.mxu0
    %1592 = vmatprep.mubr.f32.mxu0 0.0
    %1593 = vmatmul.mubr.f32.gmra.mxu0 %v1431
    %v1594 = vpop.f32.mrf.mxu0
    %v1595 = vadd.f32 %v1338, %v1594
    %v1596 = vpop.f32.mrf.mxu0
    %1597 = vmatprep.mubr.f32.mxu0 0.0
    %1598 = vmatmul.mubr.f32.gmra.mxu0 %v1434
    %v1599 = vpop.f32.mrf.mxu0
    %v1600 = vadd.f32 %v1343, %v1599
    %v1601 = vpop.f32.mrf.mxu0
    %1602 = vmatprep.mubr.f32.mxu0 0.0
    %1603 = vmatmul.mubr.f32.gmra.mxu0 %v1437
    %v1604 = vpop.f32.mrf.mxu0
    %v1605 = vadd.f32 %v1348, %v1604
    %v1606 = vpop.f32.mrf.mxu0
    %1607 = vmatprep.mubr.f32.mxu0 0.0
    %1608 = vmatmul.mubr.f32.gmra.mxu0 %v1440
    %v1609 = vpop.f32.mrf.mxu0
    %v1610 = vadd.f32 %v1353, %v1609
    %v1611 = vpop.f32.mrf.mxu0
    %1612 = vmatprep.mubr.f32.mxu0 0.0
    %1613 = vmatmul.mubr.f32.gmra.mxu0 %v1443
    %v1614 = vpop.f32.mrf.mxu0
    %v1615 = vadd.f32 %v1358, %v1614
    %v1616 = vpop.f32.mrf.mxu0
    %1617 = vmatprep.mubr.f32.mxu0 0.0
    %1618 = vmatmul.mubr.f32.gmra.mxu0 %v1446
    %v1619 = vpop.f32.mrf.mxu0
    %v1620 = vadd.f32 %v1363, %v1619
    %v1621 = vpop.f32.mrf.mxu0
    %1622 = vmatprep.mubr.f32.mxu0 0.0
    %1623 = vmatmul.mubr.f32.gmra.mxu0 %v1449
    %v1624 = vpop.f32.mrf.mxu0
    %v1625 = vadd.f32 %v1368, %v1624
    %v1626 = vpop.f32.mrf.mxu0
    %1627 = vmatprep.mubr.f32.mxu0 0.0
    %1628 = vmatmul.mubr.f32.gmra.mxu0 %v1452
    %v1629 = vpop.f32.mrf.mxu0
    %v1630 = vadd.f32 %v1373, %v1629
    %v1631 = vpop.f32.mrf.mxu0
    %1632 = vmatprep.mubr.f32.mxu0 0.0
    %1633 = vmatmul.mubr.f32.gmra.mxu0 %v1455
    %v1634 = vpop.f32.mrf.mxu0
    %v1635 = vadd.f32 %v1378, %v1634
    %v1636 = vpop.f32.mrf.mxu0
    %1637 = vmatprep.mubr.f32.mxu0 0.0
    %1638 = vmatmul.mubr.f32.gmra.mxu0 %v1458
    %v1639 = vpop.f32.mrf.mxu0
    %v1640 = vadd.f32 %v1383, %v1639
    %v1641 = vpop.f32.mrf.mxu0
    %1642 = vmatprep.mubr.f32.mxu0 0.0
    %1643 = vmatmul.mubr.f32.gmra.mxu0 %v1461
    %v1644 = vpop.f32.mrf.mxu0
    %v1645 = vadd.f32 %v1388, %v1644
    %v1646 = vpop.f32.mrf.mxu0
    %1647 = vdwg.mxu0
    %v1648 = vld [vmem:[#allocation2 + $0x9] sm:$0xff]
    %v1649 = vld [vmem:[#allocation2 + $0x11] sm:$0xff]
    %v1650 = vld [vmem:[#allocation2 + $0x19] sm:$0xff]
    %v1651 = vld [vmem:[#allocation2 + $0x21] sm:$0xff]
    %v1652 = vld [vmem:[#allocation2 + $0x29] sm:$0xff]
    %v1653 = vld [vmem:[#allocation2 + $0x31] sm:$0xff]
    %v1654 = vld [vmem:[#allocation2 + $0x39] sm:$0xff]
    %v1655 = vld [vmem:[#allocation2 + $0x41] sm:$0xff]
    %v1656 = vld [vmem:[#allocation2 + $0x49] sm:$0xff]
    %v1657 = vld [vmem:[#allocation2 + $0x51] sm:$0xff]
    %v1658 = vld [vmem:[#allocation2 + $0x59] sm:$0xff]
    %v1659 = vld [vmem:[#allocation2 + $0x61] sm:$0xff]
    %v1660 = vld [vmem:[#allocation2 + $0x69] sm:$0xff]
    %v1661 = vld [vmem:[#allocation2 + $0x71] sm:$0xff]
    %v1662 = vld [vmem:[#allocation2 + $0x79] sm:$0xff]
    %v1663 = vld [vmem:[#allocation2 + $0x81] sm:$0xff]
    %v1664 = vld [vmem:[#allocation2 + $0x89] sm:$0xff]
    %v1665 = vld [vmem:[#allocation2 + $0x91] sm:$0xff]
    %v1666 = vld [vmem:[#allocation2 + $0x99] sm:$0xff]
    %v1667 = vld [vmem:[#allocation2 + $0xa1] sm:$0xff]
    %v1668 = vld [vmem:[#allocation2 + $0xa9] sm:$0xff]
    %v1669 = vld [vmem:[#allocation2 + $0xb1] sm:$0xff]
    %v1670 = vld [vmem:[#allocation2 + $0xb9] sm:$0xff]
    %v1671 = vld [vmem:[#allocation2 + $0xc1] sm:$0xff]
    %s1672 = scalar_lea.vmem [#allocation3], 160
    %v1673 = vld [vmem:[%s1672] sm:$0xff]
    %v1674 = vld [vmem:[%s1672 + $0x8] sm:$0xff]
    %v1675 = vld [vmem:[%s1672 + $0x10] sm:$0xff]
    %v1676 = vld [vmem:[%s1672 + $0x18] sm:$0xff]
    %v1678 = vsel %vm54, %v1648, 0
    %v1681 = vsel %vm54, %v1649, 0
    %v1684 = vsel %vm54, %v1650, 0
    %v1687 = vsel %vm54, %v1651, 0
    %v1690 = vsel %vm54, %v1652, 0
    %v1693 = vsel %vm54, %v1653, 0
    %v1696 = vsel %vm54, %v1654, 0
    %v1699 = vsel %vm54, %v1655, 0
    %v1702 = vsel %vm54, %v1656, 0
    %v1705 = vsel %vm54, %v1657, 0
    %v1708 = vsel %vm54, %v1658, 0
    %v1711 = vsel %vm54, %v1659, 0
    %v1714 = vsel %vm54, %v1660, 0
    %v1717 = vsel %vm54, %v1661, 0
    %v1720 = vsel %vm54, %v1662, 0
    %v1723 = vsel %vm54, %v1663, 0
    %v1726 = vsel %vm54, %v1664, 0
    %v1729 = vsel %vm54, %v1665, 0
    %v1732 = vsel %vm54, %v1666, 0
    %v1735 = vsel %vm54, %v1667, 0
    %v1738 = vsel %vm54, %v1668, 0
    %v1741 = vsel %vm54, %v1669, 0
    %v1744 = vsel %vm54, %v1670, 0
    %v1747 = vsel %vm54, %v1671, 0
    %1749 = vmatprep.subr.mxu0 0.0
    %1750 = vmatpush1.msra.mxu0 0.0
    %1751 = vmatprep.subr.mxu0 0.0
    %1752 = vmatpush1.msra.mxu0 0.0
    %1753 = vmatprep.subr.mxu0 0.0
    %1754 = vmatpush1.msra.mxu0 0.0
    %1755 = vmatprep.subr.mxu0 0.0
    %1756 = vmatpush1.msra.mxu0 0.0
    %1757 = vmatprep.subr.mxu0 0.0
    %1758 = vmatpush1.msra.mxu0 0.0
    %1759 = vmatprep.subr.mxu0 0.0
    %1760 = vmatpush1.msra.mxu0 0.0
    %1761 = vmatprep.subr.mxu0 0.0
    %1762 = vmatpush1.msra.mxu0 0.0
    %1763 = vmatprep.subr.mxu0 0.0
    %1764 = vmatpush1.msra.mxu0 0.0
    %1765 = vmatprep.subr.mxu0 0.0
    %1766 = vmatpush1.msra.mxu0 0.0
    %1767 = vmatprep.subr.mxu0 0.0
    %1768 = vmatpush1.msra.mxu0 0.0
    %1769 = vmatprep.subr.mxu0 0.0
    %1770 = vmatpush1.msra.mxu0 0.0
    %1771 = vmatprep.subr.mxu0 0.0
    %1772 = vmatpush1.msra.mxu0 0.0
    %1773 = vmatprep.subr.mxu0 0.0
    %1774 = vmatpush1.msra.mxu0 %v1676
    %1775 = vmatprep.subr.mxu0 0.0
    %1776 = vmatpush1.msra.mxu0 %v1675
    %1777 = vmatprep.subr.mxu0 0.0
    %1778 = vmatpush1.msra.mxu0 %v1674
    %1779 = vmatprep.subr.mxu0 0.0
    %1780 = vmatpush1.msra.mxu0 %v1673
    %1781 = vmatprep.subr.mxu0 0.0
    %1782 = vmatpush2.msra.mxu0 0.0
    %1783 = vmatprep.subr.mxu0 0.0
    %1784 = vmatpush2.msra.mxu0 0.0
    %1785 = vmatprep.subr.mxu0 0.0
    %1786 = vmatpush2.msra.mxu0 0.0
    %1787 = vmatprep.subr.mxu0 0.0
    %1788 = vmatpush2.msra.mxu0 0.0
    %1789 = vmatprep.subr.mxu0 0.0
    %1790 = vmatpush2.msra.mxu0 0.0
    %1791 = vmatprep.subr.mxu0 0.0
    %1792 = vmatpush2.msra.mxu0 0.0
    %1793 = vmatprep.subr.mxu0 0.0
    %1794 = vmatpush2.msra.mxu0 0.0
    %1795 = vmatprep.subr.mxu0 0.0
    %1796 = vmatpush2.msra.mxu0 0.0
    %1797 = vmatprep.subr.mxu0 0.0
    %1798 = vmatpush2.msra.mxu0 0.0
    %1799 = vmatprep.subr.mxu0 0.0
    %1800 = vmatpush2.msra.mxu0 0.0
    %1801 = vmatprep.subr.mxu0 0.0
    %1802 = vmatpush2.msra.mxu0 0.0
    %1803 = vmatprep.subr.mxu0 0.0
    %1804 = vmatpush2.msra.mxu0 0.0
    %1805 = vmatprep.subr.mxu0 0.0
    %1806 = vmatpush2.msra.mxu0 0.0
    %1807 = vmatprep.subr.mxu0 0.0
    %1808 = vmatpush2.msra.mxu0 0.0
    %1809 = vmatprep.subr.mxu0 0.0
    %1810 = vmatpush2.msra.mxu0 0.0
    %1811 = vmatprep.subr.mxu0 0.0
    %1812 = vmatpush2.msra.mxu0 0.0
    %1813 = vmatprep.mubr.f32.mxu0 0.0
    %1814 = vmatmul.mubr.f32.gmra.mxu0 %v1678
    %v1815 = vpop.f32.mrf.mxu0
    %v1816 = vadd.f32 0.0, %v1815
    %v1817 = vpop.f32.mrf.mxu0
    %1818 = vmatprep.mubr.f32.mxu0 0.0
    %1819 = vmatmul.mubr.f32.gmra.mxu0 %v1681
    %v1820 = vpop.f32.mrf.mxu0
    %v1821 = vadd.f32 0.0, %v1820
    %v1822 = vpop.f32.mrf.mxu0
    %1823 = vmatprep.mubr.f32.mxu0 0.0
    %1824 = vmatmul.mubr.f32.gmra.mxu0 %v1684
    %v1825 = vpop.f32.mrf.mxu0
    %v1826 = vadd.f32 0.0, %v1825
    %v1827 = vpop.f32.mrf.mxu0
    %1828 = vmatprep.mubr.f32.mxu0 0.0
    %1829 = vmatmul.mubr.f32.gmra.mxu0 %v1687
    %v1830 = vpop.f32.mrf.mxu0
    %v1831 = vadd.f32 0.0, %v1830
    %v1832 = vpop.f32.mrf.mxu0
    %1833 = vmatprep.mubr.f32.mxu0 0.0
    %1834 = vmatmul.mubr.f32.gmra.mxu0 %v1690
    %v1835 = vpop.f32.mrf.mxu0
    %v1836 = vadd.f32 0.0, %v1835
    %v1837 = vpop.f32.mrf.mxu0
    %1838 = vmatprep.mubr.f32.mxu0 0.0
    %1839 = vmatmul.mubr.f32.gmra.mxu0 %v1693
    %v1840 = vpop.f32.mrf.mxu0
    %v1841 = vadd.f32 0.0, %v1840
    %v1842 = vpop.f32.mrf.mxu0
    %1843 = vmatprep.mubr.f32.mxu0 0.0
    %1844 = vmatmul.mubr.f32.gmra.mxu0 %v1696
    %v1845 = vpop.f32.mrf.mxu0
    %v1846 = vadd.f32 0.0, %v1845
    %v1847 = vpop.f32.mrf.mxu0
    %1848 = vmatprep.mubr.f32.mxu0 0.0
    %1849 = vmatmul.mubr.f32.gmra.mxu0 %v1699
    %v1850 = vpop.f32.mrf.mxu0
    %v1851 = vadd.f32 0.0, %v1850
    %v1852 = vpop.f32.mrf.mxu0
    %1853 = vmatprep.mubr.f32.mxu0 0.0
    %1854 = vmatmul.mubr.f32.gmra.mxu0 %v1702
    %v1855 = vpop.f32.mrf.mxu0
    %v1856 = vadd.f32 0.0, %v1855
    %v1857 = vpop.f32.mrf.mxu0
    %1858 = vmatprep.mubr.f32.mxu0 0.0
    %1859 = vmatmul.mubr.f32.gmra.mxu0 %v1705
    %v1860 = vpop.f32.mrf.mxu0
    %v1861 = vadd.f32 0.0, %v1860
    %v1862 = vpop.f32.mrf.mxu0
    %1863 = vmatprep.mubr.f32.mxu0 0.0
    %1864 = vmatmul.mubr.f32.gmra.mxu0 %v1708
    %v1865 = vpop.f32.mrf.mxu0
    %v1866 = vadd.f32 0.0, %v1865
    %v1867 = vpop.f32.mrf.mxu0
    %1868 = vmatprep.mubr.f32.mxu0 0.0
    %1869 = vmatmul.mubr.f32.gmra.mxu0 %v1711
    %v1870 = vpop.f32.mrf.mxu0
    %v1871 = vadd.f32 0.0, %v1870
    %v1872 = vpop.f32.mrf.mxu0
    %1873 = vmatprep.mubr.f32.mxu0 0.0
    %1874 = vmatmul.mubr.f32.gmra.mxu0 %v1714
    %v1875 = vpop.f32.mrf.mxu0
    %v1876 = vadd.f32 0.0, %v1875
    %v1877 = vpop.f32.mrf.mxu0
    %1878 = vmatprep.mubr.f32.mxu0 0.0
    %1879 = vmatmul.mubr.f32.gmra.mxu0 %v1717
    %v1880 = vpop.f32.mrf.mxu0
    %v1881 = vadd.f32 0.0, %v1880
    %v1882 = vpop.f32.mrf.mxu0
    %1883 = vmatprep.mubr.f32.mxu0 0.0
    %1884 = vmatmul.mubr.f32.gmra.mxu0 %v1720
    %v1885 = vpop.f32.mrf.mxu0
    %v1886 = vadd.f32 0.0, %v1885
    %v1887 = vpop.f32.mrf.mxu0
    %1888 = vmatprep.mubr.f32.mxu0 0.0
    %1889 = vmatmul.mubr.f32.gmra.mxu0 %v1723
    %v1890 = vpop.f32.mrf.mxu0
    %v1891 = vadd.f32 0.0, %v1890
    %v1892 = vpop.f32.mrf.mxu0
    %1893 = vmatprep.mubr.f32.mxu0 0.0
    %1894 = vmatmul.mubr.f32.gmra.mxu0 %v1726
    %v1895 = vpop.f32.mrf.mxu0
    %v1896 = vadd.f32 0.0, %v1895
    %v1897 = vpop.f32.mrf.mxu0
    %1898 = vmatprep.mubr.f32.mxu0 0.0
    %1899 = vmatmul.mubr.f32.gmra.mxu0 %v1729
    %v1900 = vpop.f32.mrf.mxu0
    %v1901 = vadd.f32 0.0, %v1900
    %v1902 = vpop.f32.mrf.mxu0
    %1903 = vmatprep.mubr.f32.mxu0 0.0
    %1904 = vmatmul.mubr.f32.gmra.mxu0 %v1732
    %v1905 = vpop.f32.mrf.mxu0
    %v1906 = vadd.f32 0.0, %v1905
    %v1907 = vpop.f32.mrf.mxu0
    %1908 = vmatprep.mubr.f32.mxu0 0.0
    %1909 = vmatmul.mubr.f32.gmra.mxu0 %v1735
    %v1910 = vpop.f32.mrf.mxu0
    %v1911 = vadd.f32 0.0, %v1910
    %v1912 = vpop.f32.mrf.mxu0
    %1913 = vmatprep.mubr.f32.mxu0 0.0
    %1914 = vmatmul.mubr.f32.gmra.mxu0 %v1738
    %v1915 = vpop.f32.mrf.mxu0
    %v1916 = vadd.f32 0.0, %v1915
    %v1917 = vpop.f32.mrf.mxu0
    %1918 = vmatprep.mubr.f32.mxu0 0.0
    %1919 = vmatmul.mubr.f32.gmra.mxu0 %v1741
    %v1920 = vpop.f32.mrf.mxu0
    %v1921 = vadd.f32 0.0, %v1920
    %v1922 = vpop.f32.mrf.mxu0
    %1923 = vmatprep.mubr.f32.mxu0 0.0
    %1924 = vmatmul.mubr.f32.gmra.mxu0 %v1744
    %v1925 = vpop.f32.mrf.mxu0
    %v1926 = vadd.f32 0.0, %v1925
    %v1927 = vpop.f32.mrf.mxu0
    %1928 = vmatprep.mubr.f32.mxu0 0.0
    %1929 = vmatmul.mubr.f32.gmra.mxu0 %v1747
    %v1930 = vpop.f32.mrf.mxu0
    %v1931 = vadd.f32 0.0, %v1930
    %v1932 = vpop.f32.mrf.mxu0
    %1933 = vdwg.mxu0
    %v1934 = vadd.f32 %v1530, %v1816
    %v1935 = vadd.f32 %v1535, %v1821
    %v1936 = vadd.f32 %v1540, %v1826
    %v1937 = vadd.f32 %v1545, %v1831
    %v1938 = vadd.f32 %v1550, %v1836
    %v1939 = vadd.f32 %v1555, %v1841
    %v1940 = vadd.f32 %v1560, %v1846
    %v1941 = vadd.f32 %v1565, %v1851
    %v1942 = vadd.f32 %v1570, %v1856
    %v1943 = vadd.f32 %v1575, %v1861
    %v1944 = vadd.f32 %v1580, %v1866
    %v1945 = vadd.f32 %v1585, %v1871
    %v1946 = vadd.f32 %v1590, %v1876
    %v1947 = vadd.f32 %v1595, %v1881
    %v1948 = vadd.f32 %v1600, %v1886
    %v1949 = vadd.f32 %v1605, %v1891
    %v1950 = vadd.f32 %v1610, %v1896
    %v1951 = vadd.f32 %v1615, %v1901
    %v1952 = vadd.f32 %v1620, %v1906
    %v1953 = vadd.f32 %v1625, %v1911
    %v1954 = vadd.f32 %v1630, %v1916
    %v1955 = vadd.f32 %v1635, %v1921
    %v1956 = vadd.f32 %v1640, %v1926
    %v1957 = vadd.f32 %v1645, %v1931
    %s1958 = scalar_lea.vmem %s2, 1
    %v1959 = vld [vmem:[%s1958] sm:$0x1]
    %v1961 = vlaneseq
    %v1962 = vshrl.u32 %v1961, 7
    %v1963 = vsub.s32 0, %v1962
    %v1964 = vrot.slane %v1959, %v1963
    %v1966 = vadd.f32 %v1934, %v1964
    %v1967 = vadd.f32 %v1935, %v1964
    %v1968 = vadd.f32 %v1936, %v1964
    %v1969 = vadd.f32 %v1937, %v1964
    %v1970 = vadd.f32 %v1938, %v1964
    %v1971 = vadd.f32 %v1939, %v1964
    %v1972 = vadd.f32 %v1940, %v1964
    %v1973 = vadd.f32 %v1941, %v1964
    %v1974 = vadd.f32 %v1942, %v1964
    %v1975 = vadd.f32 %v1943, %v1964
    %v1976 = vadd.f32 %v1944, %v1964
    %v1977 = vadd.f32 %v1945, %v1964
    %v1978 = vadd.f32 %v1946, %v1964
    %v1979 = vadd.f32 %v1947, %v1964
    %v1980 = vadd.f32 %v1948, %v1964
    %v1981 = vadd.f32 %v1949, %v1964
    %v1982 = vadd.f32 %v1950, %v1964
    %v1983 = vadd.f32 %v1951, %v1964
    %v1984 = vadd.f32 %v1952, %v1964
    %v1985 = vadd.f32 %v1953, %v1964
    %v1986 = vadd.f32 %v1954, %v1964
    %v1987 = vadd.f32 %v1955, %v1964
    %v1988 = vadd.f32 %v1956, %v1964
    %v1989 = vadd.f32 %v1957, %v1964
    %v1990 = vmax.f32 %v1966, 0.0
    %v1991 = vmax.f32 %v1967, 0.0
    %v1992 = vmax.f32 %v1968, 0.0
    %v1993 = vmax.f32 %v1969, 0.0
    %v1994 = vmax.f32 %v1970, 0.0
    %v1995 = vmax.f32 %v1971, 0.0
    %v1996 = vmax.f32 %v1972, 0.0
    %v1997 = vmax.f32 %v1973, 0.0
    %v1998 = vmax.f32 %v1974, 0.0
    %v1999 = vmax.f32 %v1975, 0.0
    %v2000 = vmax.f32 %v1976, 0.0
    %v2001 = vmax.f32 %v1977, 0.0
    %v2002 = vmax.f32 %v1978, 0.0
    %v2003 = vmax.f32 %v1979, 0.0
    %v2004 = vmax.f32 %v1980, 0.0
    %v2005 = vmax.f32 %v1981, 0.0
    %v2006 = vmax.f32 %v1982, 0.0
    %v2007 = vmax.f32 %v1983, 0.0
    %v2008 = vmax.f32 %v1984, 0.0
    %v2009 = vmax.f32 %v1985, 0.0
    %v2010 = vmax.f32 %v1986, 0.0
    %v2011 = vmax.f32 %v1987, 0.0
    %v2012 = vmax.f32 %v1988, 0.0
    %v2013 = vmax.f32 %v1989, 0.0
    %v2014 = vsel %vm1025, %v1990, 0.0
    %v2015 = vsel %vm1026, %v1991, 0.0
    %v2016 = vsel %vm1027, %v1992, 0.0
    %v2017 = vsel %vm1025, %v1993, 0.0
    %v2018 = vsel %vm1026, %v1994, 0.0
    %v2019 = vsel %vm1027, %v1995, 0.0
    %v2020 = vsel %vm1025, %v1996, 0.0
    %v2021 = vsel %vm1026, %v1997, 0.0
    %v2022 = vsel %vm1027, %v1998, 0.0
    %v2023 = vsel %vm1025, %v1999, 0.0
    %v2024 = vsel %vm1026, %v2000, 0.0
    %v2025 = vsel %vm1027, %v2001, 0.0
    %v2026 = vsel %vm1025, %v2002, 0.0
    %v2027 = vsel %vm1026, %v2003, 0.0
    %v2028 = vsel %vm1027, %v2004, 0.0
    %v2029 = vsel %vm1025, %v2005, 0.0
    %v2030 = vsel %vm1026, %v2006, 0.0
    %v2031 = vsel %vm1027, %v2007, 0.0
    %v2032 = vsel %vm1025, %v2008, 0.0
    %v2033 = vsel %vm1026, %v2009, 0.0
    %v2034 = vsel %vm1027, %v2010, 0.0
    %v2035 = vsel %vm1025, %v2011, 0.0
    %v2036 = vsel %vm1026, %v2012, 0.0
    %v2037 = vsel %vm1027, %v2013, 0.0
    %2038 = vst [vmem:[#allocation2 + $0x8] sm:$0xff] %v2014
    %2039 = vst [vmem:[#allocation2 + $0x10] sm:$0xff] %v2015
    %2040 = vst [vmem:[#allocation2 + $0x18] sm:$0xff] %v2016
    %2041 = vst [vmem:[#allocation2 + $0x20] sm:$0xff] %v2017
    %2042 = vst [vmem:[#allocation2 + $0x28] sm:$0xff] %v2018
    %2043 = vst [vmem:[#allocation2 + $0x30] sm:$0xff] %v2019
    %2044 = vst [vmem:[#allocation2 + $0x38] sm:$0xff] %v2020
    %2045 = vst [vmem:[#allocation2 + $0x40] sm:$0xff] %v2021
    %2046 = vst [vmem:[#allocation2 + $0x48] sm:$0xff] %v2022
    %2047 = vst [vmem:[#allocation2 + $0x50] sm:$0xff] %v2023
    %2048 = vst [vmem:[#allocation2 + $0x58] sm:$0xff] %v2024
    %2049 = vst [vmem:[#allocation2 + $0x60] sm:$0xff] %v2025
    %2050 = vst [vmem:[#allocation2 + $0x68] sm:$0xff] %v2026
    %2051 = vst [vmem:[#allocation2 + $0x70] sm:$0xff] %v2027
    %2052 = vst [vmem:[#allocation2 + $0x78] sm:$0xff] %v2028
    %2053 = vst [vmem:[#allocation2 + $0x80] sm:$0xff] %v2029
    %2054 = vst [vmem:[#allocation2 + $0x88] sm:$0xff] %v2030
    %2055 = vst [vmem:[#allocation2 + $0x90] sm:$0xff] %v2031
    %2056 = vst [vmem:[#allocation2 + $0x98] sm:$0xff] %v2032
    %2057 = vst [vmem:[#allocation2 + $0xa0] sm:$0xff] %v2033
    %2058 = vst [vmem:[#allocation2 + $0xa8] sm:$0xff] %v2034
    %2059 = vst [vmem:[#allocation2 + $0xb0] sm:$0xff] %v2035
    %2060 = vst [vmem:[#allocation2 + $0xb8] sm:$0xff] %v2036
    %2061 = vst [vmem:[#allocation2 + $0xc0] sm:$0xff] %v2037
    %v2062 = vld [vmem:[#allocation2 + $0x7] sm:$0xff]
    %v2063 = vld [vmem:[#allocation2 + $0xf] sm:$0xff]
    %v2064 = vld [vmem:[#allocation2 + $0x17] sm:$0xff]
    %v2065 = vld [vmem:[#allocation2 + $0x1f] sm:$0xff]
    %v2066 = vld [vmem:[#allocation2 + $0x27] sm:$0xff]
    %v2067 = vld [vmem:[#allocation2 + $0x2f] sm:$0xff]
    %v2068 = vld [vmem:[#allocation2 + $0x37] sm:$0xff]
    %v2069 = vld [vmem:[#allocation2 + $0x3f] sm:$0xff]
    %v2070 = vld [vmem:[#allocation2 + $0x47] sm:$0xff]
    %v2071 = vld [vmem:[#allocation2 + $0x4f] sm:$0xff]
    %v2072 = vld [vmem:[#allocation2 + $0x57] sm:$0xff]
    %v2073 = vld [vmem:[#allocation2 + $0x5f] sm:$0xff]
    %v2074 = vld [vmem:[#allocation2 + $0x67] sm:$0xff]
    %v2075 = vld [vmem:[#allocation2 + $0x6f] sm:$0xff]
    %v2076 = vld [vmem:[#allocation2 + $0x77] sm:$0xff]
    %v2077 = vld [vmem:[#allocation2 + $0x7f] sm:$0xff]
    %v2078 = vld [vmem:[#allocation2 + $0x87] sm:$0xff]
    %v2079 = vld [vmem:[#allocation2 + $0x8f] sm:$0xff]
    %v2080 = vld [vmem:[#allocation2 + $0x97] sm:$0xff]
    %v2081 = vld [vmem:[#allocation2 + $0x9f] sm:$0xff]
    %v2082 = vld [vmem:[#allocation2 + $0xa7] sm:$0xff]
    %v2083 = vld [vmem:[#allocation2 + $0xaf] sm:$0xff]
    %v2084 = vld [vmem:[#allocation2 + $0xb7] sm:$0xff]
    %v2085 = vld [vmem:[#allocation2 + $0xbf] sm:$0xff]
    %s2086 = scalar_lea.vmem [#allocation3], 192
    %v2087 = vld [vmem:[%s2086] sm:$0xff]
    %v2088 = vld [vmem:[%s2086 + $0x8] sm:$0xff]
    %v2089 = vld [vmem:[%s2086 + $0x10] sm:$0xff]
    %v2090 = vld [vmem:[%s2086 + $0x18] sm:$0xff]
    %v2091 = vld [vmem:[#allocation2 + $0x8] sm:$0xff]
    %v2092 = vld [vmem:[#allocation2 + $0x10] sm:$0xff]
    %v2093 = vld [vmem:[#allocation2 + $0x18] sm:$0xff]
    %v2094 = vld [vmem:[#allocation2 + $0x20] sm:$0xff]
    %v2095 = vld [vmem:[#allocation2 + $0x28] sm:$0xff]
    %v2096 = vld [vmem:[#allocation2 + $0x30] sm:$0xff]
    %v2097 = vld [vmem:[#allocation2 + $0x38] sm:$0xff]
    %v2098 = vld [vmem:[#allocation2 + $0x40] sm:$0xff]
    %v2099 = vld [vmem:[#allocation2 + $0x48] sm:$0xff]
    %v2100 = vld [vmem:[#allocation2 + $0x50] sm:$0xff]
    %v2101 = vld [vmem:[#allocation2 + $0x58] sm:$0xff]
    %v2102 = vld [vmem:[#allocation2 + $0x60] sm:$0xff]
    %v2103 = vld [vmem:[#allocation2 + $0x68] sm:$0xff]
    %v2104 = vld [vmem:[#allocation2 + $0x70] sm:$0xff]
    %v2105 = vld [vmem:[#allocation2 + $0x78] sm:$0xff]
    %v2106 = vld [vmem:[#allocation2 + $0x80] sm:$0xff]
    %v2107 = vld [vmem:[#allocation2 + $0x88] sm:$0xff]
    %v2108 = vld [vmem:[#allocation2 + $0x90] sm:$0xff]
    %v2109 = vld [vmem:[#allocation2 + $0x98] sm:$0xff]
    %v2110 = vld [vmem:[#allocation2 + $0xa0] sm:$0xff]
    %v2111 = vld [vmem:[#allocation2 + $0xa8] sm:$0xff]
    %v2112 = vld [vmem:[#allocation2 + $0xb0] sm:$0xff]
    %v2113 = vld [vmem:[#allocation2 + $0xb8] sm:$0xff]
    %v2114 = vld [vmem:[#allocation2 + $0xc0] sm:$0xff]
    %s2115 = scalar_lea.vmem [#allocation3], 224
    %v2116 = vld [vmem:[%s2115] sm:$0xff]
    %v2117 = vld [vmem:[%s2115 + $0x8] sm:$0xff]
    %v2118 = vld [vmem:[%s2115 + $0x10] sm:$0xff]
    %v2119 = vld [vmem:[%s2115 + $0x18] sm:$0xff]
    %v2121 = vsel %vm54, %v2091, 0
    %v2124 = vsel %vm54, %v2092, 0
    %v2127 = vsel %vm54, %v2093, 0
    %v2130 = vsel %vm54, %v2094, 0
    %v2133 = vsel %vm54, %v2095, 0
    %v2136 = vsel %vm54, %v2096, 0
    %v2139 = vsel %vm54, %v2097, 0
    %v2142 = vsel %vm54, %v2098, 0
    %v2145 = vsel %vm54, %v2099, 0
    %v2148 = vsel %vm54, %v2100, 0
    %v2151 = vsel %vm54, %v2101, 0
    %v2154 = vsel %vm54, %v2102, 0
    %v2157 = vsel %vm54, %v2103, 0
    %v2160 = vsel %vm54, %v2104, 0
    %v2163 = vsel %vm54, %v2105, 0
    %v2166 = vsel %vm54, %v2106, 0
    %v2169 = vsel %vm54, %v2107, 0
    %v2172 = vsel %vm54, %v2108, 0
    %v2175 = vsel %vm54, %v2109, 0
    %v2178 = vsel %vm54, %v2110, 0
    %v2181 = vsel %vm54, %v2111, 0
    %v2184 = vsel %vm54, %v2112, 0
    %v2187 = vsel %vm54, %v2113, 0
    %v2190 = vsel %vm54, %v2114, 0
    %2192 = vmatprep.subr.mxu0 0.0
    %2193 = vmatpush1.msra.mxu0 0.0
    %2194 = vmatprep.subr.mxu0 0.0
    %2195 = vmatpush1.msra.mxu0 0.0
    %2196 = vmatprep.subr.mxu0 0.0
    %2197 = vmatpush1.msra.mxu0 0.0
    %2198 = vmatprep.subr.mxu0 0.0
    %2199 = vmatpush1.msra.mxu0 0.0
    %2200 = vmatprep.subr.mxu0 0.0
    %2201 = vmatpush1.msra.mxu0 0.0
    %2202 = vmatprep.subr.mxu0 0.0
    %2203 = vmatpush1.msra.mxu0 0.0
    %2204 = vmatprep.subr.mxu0 0.0
    %2205 = vmatpush1.msra.mxu0 0.0
    %2206 = vmatprep.subr.mxu0 0.0
    %2207 = vmatpush1.msra.mxu0 0.0
    %2208 = vmatprep.subr.mxu0 0.0
    %2209 = vmatpush1.msra.mxu0 0.0
    %2210 = vmatprep.subr.mxu0 0.0
    %2211 = vmatpush1.msra.mxu0 0.0
    %2212 = vmatprep.subr.mxu0 0.0
    %2213 = vmatpush1.msra.mxu0 0.0
    %2214 = vmatprep.subr.mxu0 0.0
    %2215 = vmatpush1.msra.mxu0 0.0
    %2216 = vmatprep.subr.mxu0 0.0
    %2217 = vmatpush1.msra.mxu0 %v2119
    %2218 = vmatprep.subr.mxu0 0.0
    %2219 = vmatpush1.msra.mxu0 %v2118
    %2220 = vmatprep.subr.mxu0 0.0
    %2221 = vmatpush1.msra.mxu0 %v2117
    %2222 = vmatprep.subr.mxu0 0.0
    %2223 = vmatpush1.msra.mxu0 %v2116
    %2224 = vmatprep.subr.mxu0 0.0
    %2225 = vmatpush2.msra.mxu0 0.0
    %2226 = vmatprep.subr.mxu0 0.0
    %2227 = vmatpush2.msra.mxu0 0.0
    %2228 = vmatprep.subr.mxu0 0.0
    %2229 = vmatpush2.msra.mxu0 0.0
    %2230 = vmatprep.subr.mxu0 0.0
    %2231 = vmatpush2.msra.mxu0 0.0
    %2232 = vmatprep.subr.mxu0 0.0
    %2233 = vmatpush2.msra.mxu0 0.0
    %2234 = vmatprep.subr.mxu0 0.0
    %2235 = vmatpush2.msra.mxu0 0.0
    %2236 = vmatprep.subr.mxu0 0.0
    %2237 = vmatpush2.msra.mxu0 0.0
    %2238 = vmatprep.subr.mxu0 0.0
    %2239 = vmatpush2.msra.mxu0 0.0
    %2240 = vmatprep.subr.mxu0 0.0
    %2241 = vmatpush2.msra.mxu0 0.0
    %2242 = vmatprep.subr.mxu0 0.0
    %2243 = vmatpush2.msra.mxu0 0.0
    %2244 = vmatprep.subr.mxu0 0.0
    %2245 = vmatpush2.msra.mxu0 0.0
    %2246 = vmatprep.subr.mxu0 0.0
    %2247 = vmatpush2.msra.mxu0 0.0
    %2248 = vmatprep.subr.mxu0 0.0
    %2249 = vmatpush2.msra.mxu0 0.0
    %2250 = vmatprep.subr.mxu0 0.0
    %2251 = vmatpush2.msra.mxu0 0.0
    %2252 = vmatprep.subr.mxu0 0.0
    %2253 = vmatpush2.msra.mxu0 0.0
    %2254 = vmatprep.subr.mxu0 0.0
    %2255 = vmatpush2.msra.mxu0 0.0
    %2256 = vmatprep.mubr.f32.mxu0 0.0
    %2257 = vmatmul.mubr.f32.gmra.mxu0 %v2121
    %v2258 = vpop.f32.mrf.mxu0
    %v2259 = vadd.f32 0.0, %v2258
    %v2260 = vpop.f32.mrf.mxu0
    %2261 = vmatprep.mubr.f32.mxu0 0.0
    %2262 = vmatmul.mubr.f32.gmra.mxu0 %v2124
    %v2263 = vpop.f32.mrf.mxu0
    %v2264 = vadd.f32 0.0, %v2263
    %v2265 = vpop.f32.mrf.mxu0
    %2266 = vmatprep.mubr.f32.mxu0 0.0
    %2267 = vmatmul.mubr.f32.gmra.mxu0 %v2127
    %v2268 = vpop.f32.mrf.mxu0
    %v2269 = vadd.f32 0.0, %v2268
    %v2270 = vpop.f32.mrf.mxu0
    %2271 = vmatprep.mubr.f32.mxu0 0.0
    %2272 = vmatmul.mubr.f32.gmra.mxu0 %v2130
    %v2273 = vpop.f32.mrf.mxu0
    %v2274 = vadd.f32 0.0, %v2273
    %v2275 = vpop.f32.mrf.mxu0
    %2276 = vmatprep.mubr.f32.mxu0 0.0
    %2277 = vmatmul.mubr.f32.gmra.mxu0 %v2133
    %v2278 = vpop.f32.mrf.mxu0
    %v2279 = vadd.f32 0.0, %v2278
    %v2280 = vpop.f32.mrf.mxu0
    %2281 = vmatprep.mubr.f32.mxu0 0.0
    %2282 = vmatmul.mubr.f32.gmra.mxu0 %v2136
    %v2283 = vpop.f32.mrf.mxu0
    %v2284 = vadd.f32 0.0, %v2283
    %v2285 = vpop.f32.mrf.mxu0
    %2286 = vmatprep.mubr.f32.mxu0 0.0
    %2287 = vmatmul.mubr.f32.gmra.mxu0 %v2139
    %v2288 = vpop.f32.mrf.mxu0
    %v2289 = vadd.f32 0.0, %v2288
    %v2290 = vpop.f32.mrf.mxu0
    %2291 = vmatprep.mubr.f32.mxu0 0.0
    %2292 = vmatmul.mubr.f32.gmra.mxu0 %v2142
    %v2293 = vpop.f32.mrf.mxu0
    %v2294 = vadd.f32 0.0, %v2293
    %v2295 = vpop.f32.mrf.mxu0
    %2296 = vmatprep.mubr.f32.mxu0 0.0
    %2297 = vmatmul.mubr.f32.gmra.mxu0 %v2145
    %v2298 = vpop.f32.mrf.mxu0
    %v2299 = vadd.f32 0.0, %v2298
    %v2300 = vpop.f32.mrf.mxu0
    %2301 = vmatprep.mubr.f32.mxu0 0.0
    %2302 = vmatmul.mubr.f32.gmra.mxu0 %v2148
    %v2303 = vpop.f32.mrf.mxu0
    %v2304 = vadd.f32 0.0, %v2303
    %v2305 = vpop.f32.mrf.mxu0
    %2306 = vmatprep.mubr.f32.mxu0 0.0
    %2307 = vmatmul.mubr.f32.gmra.mxu0 %v2151
    %v2308 = vpop.f32.mrf.mxu0
    %v2309 = vadd.f32 0.0, %v2308
    %v2310 = vpop.f32.mrf.mxu0
    %2311 = vmatprep.mubr.f32.mxu0 0.0
    %2312 = vmatmul.mubr.f32.gmra.mxu0 %v2154
    %v2313 = vpop.f32.mrf.mxu0
    %v2314 = vadd.f32 0.0, %v2313
    %v2315 = vpop.f32.mrf.mxu0
    %2316 = vmatprep.mubr.f32.mxu0 0.0
    %2317 = vmatmul.mubr.f32.gmra.mxu0 %v2157
    %v2318 = vpop.f32.mrf.mxu0
    %v2319 = vadd.f32 0.0, %v2318
    %v2320 = vpop.f32.mrf.mxu0
    %2321 = vmatprep.mubr.f32.mxu0 0.0
    %2322 = vmatmul.mubr.f32.gmra.mxu0 %v2160
    %v2323 = vpop.f32.mrf.mxu0
    %v2324 = vadd.f32 0.0, %v2323
    %v2325 = vpop.f32.mrf.mxu0
    %2326 = vmatprep.mubr.f32.mxu0 0.0
    %2327 = vmatmul.mubr.f32.gmra.mxu0 %v2163
    %v2328 = vpop.f32.mrf.mxu0
    %v2329 = vadd.f32 0.0, %v2328
    %v2330 = vpop.f32.mrf.mxu0
    %2331 = vmatprep.mubr.f32.mxu0 0.0
    %2332 = vmatmul.mubr.f32.gmra.mxu0 %v2166
    %v2333 = vpop.f32.mrf.mxu0
    %v2334 = vadd.f32 0.0, %v2333
    %v2335 = vpop.f32.mrf.mxu0
    %2336 = vmatprep.mubr.f32.mxu0 0.0
    %2337 = vmatmul.mubr.f32.gmra.mxu0 %v2169
    %v2338 = vpop.f32.mrf.mxu0
    %v2339 = vadd.f32 0.0, %v2338
    %v2340 = vpop.f32.mrf.mxu0
    %2341 = vmatprep.mubr.f32.mxu0 0.0
    %2342 = vmatmul.mubr.f32.gmra.mxu0 %v2172
    %v2343 = vpop.f32.mrf.mxu0
    %v2344 = vadd.f32 0.0, %v2343
    %v2345 = vpop.f32.mrf.mxu0
    %2346 = vmatprep.mubr.f32.mxu0 0.0
    %2347 = vmatmul.mubr.f32.gmra.mxu0 %v2175
    %v2348 = vpop.f32.mrf.mxu0
    %v2349 = vadd.f32 0.0, %v2348
    %v2350 = vpop.f32.mrf.mxu0
    %2351 = vmatprep.mubr.f32.mxu0 0.0
    %2352 = vmatmul.mubr.f32.gmra.mxu0 %v2178
    %v2353 = vpop.f32.mrf.mxu0
    %v2354 = vadd.f32 0.0, %v2353
    %v2355 = vpop.f32.mrf.mxu0
    %2356 = vmatprep.mubr.f32.mxu0 0.0
    %2357 = vmatmul.mubr.f32.gmra.mxu0 %v2181
    %v2358 = vpop.f32.mrf.mxu0
    %v2359 = vadd.f32 0.0, %v2358
    %v2360 = vpop.f32.mrf.mxu0
    %2361 = vmatprep.mubr.f32.mxu0 0.0
    %2362 = vmatmul.mubr.f32.gmra.mxu0 %v2184
    %v2363 = vpop.f32.mrf.mxu0
    %v2364 = vadd.f32 0.0, %v2363
    %v2365 = vpop.f32.mrf.mxu0
    %2366 = vmatprep.mubr.f32.mxu0 0.0
    %2367 = vmatmul.mubr.f32.gmra.mxu0 %v2187
    %v2368 = vpop.f32.mrf.mxu0
    %v2369 = vadd.f32 0.0, %v2368
    %v2370 = vpop.f32.mrf.mxu0
    %2371 = vmatprep.mubr.f32.mxu0 0.0
    %2372 = vmatmul.mubr.f32.gmra.mxu0 %v2190
    %v2373 = vpop.f32.mrf.mxu0
    %v2374 = vadd.f32 0.0, %v2373
    %v2375 = vpop.f32.mrf.mxu0
    %2376 = vdwg.mxu0
    %v2378 = vsel %vm54, %v2062, 0
    %v2381 = vsel %vm54, %v2063, 0
    %v2384 = vsel %vm54, %v2064, 0
    %v2387 = vsel %vm54, %v2065, 0
    %v2390 = vsel %vm54, %v2066, 0
    %v2393 = vsel %vm54, %v2067, 0
    %v2396 = vsel %vm54, %v2068, 0
    %v2399 = vsel %vm54, %v2069, 0
    %v2402 = vsel %vm54, %v2070, 0
    %v2405 = vsel %vm54, %v2071, 0
    %v2408 = vsel %vm54, %v2072, 0
    %v2411 = vsel %vm54, %v2073, 0
    %v2414 = vsel %vm54, %v2074, 0
    %v2417 = vsel %vm54, %v2075, 0
    %v2420 = vsel %vm54, %v2076, 0
    %v2423 = vsel %vm54, %v2077, 0
    %v2426 = vsel %vm54, %v2078, 0
    %v2429 = vsel %vm54, %v2079, 0
    %v2432 = vsel %vm54, %v2080, 0
    %v2435 = vsel %vm54, %v2081, 0
    %v2438 = vsel %vm54, %v2082, 0
    %v2441 = vsel %vm54, %v2083, 0
    %v2444 = vsel %vm54, %v2084, 0
    %v2447 = vsel %vm54, %v2085, 0
    %2449 = vmatprep.subr.mxu0 0.0
    %2450 = vmatpush1.msra.mxu0 0.0
    %2451 = vmatprep.subr.mxu0 0.0
    %2452 = vmatpush1.msra.mxu0 0.0
    %2453 = vmatprep.subr.mxu0 0.0
    %2454 = vmatpush1.msra.mxu0 0.0
    %2455 = vmatprep.subr.mxu0 0.0
    %2456 = vmatpush1.msra.mxu0 0.0
    %2457 = vmatprep.subr.mxu0 0.0
    %2458 = vmatpush1.msra.mxu0 0.0
    %2459 = vmatprep.subr.mxu0 0.0
    %2460 = vmatpush1.msra.mxu0 0.0
    %2461 = vmatprep.subr.mxu0 0.0
    %2462 = vmatpush1.msra.mxu0 0.0
    %2463 = vmatprep.subr.mxu0 0.0
    %2464 = vmatpush1.msra.mxu0 0.0
    %2465 = vmatprep.subr.mxu0 0.0
    %2466 = vmatpush1.msra.mxu0 0.0
    %2467 = vmatprep.subr.mxu0 0.0
    %2468 = vmatpush1.msra.mxu0 0.0
    %2469 = vmatprep.subr.mxu0 0.0
    %2470 = vmatpush1.msra.mxu0 0.0
    %2471 = vmatprep.subr.mxu0 0.0
    %2472 = vmatpush1.msra.mxu0 0.0
    %2473 = vmatprep.subr.mxu0 0.0
    %2474 = vmatpush1.msra.mxu0 %v2090
    %2475 = vmatprep.subr.mxu0 0.0
    %2476 = vmatpush1.msra.mxu0 %v2089
    %2477 = vmatprep.subr.mxu0 0.0
    %2478 = vmatpush1.msra.mxu0 %v2088
    %2479 = vmatprep.subr.mxu0 0.0
    %2480 = vmatpush1.msra.mxu0 %v2087
    %2481 = vmatprep.subr.mxu0 0.0
    %2482 = vmatpush2.msra.mxu0 0.0
    %2483 = vmatprep.subr.mxu0 0.0
    %2484 = vmatpush2.msra.mxu0 0.0
    %2485 = vmatprep.subr.mxu0 0.0
    %2486 = vmatpush2.msra.mxu0 0.0
    %2487 = vmatprep.subr.mxu0 0.0
    %2488 = vmatpush2.msra.mxu0 0.0
    %2489 = vmatprep.subr.mxu0 0.0
    %2490 = vmatpush2.msra.mxu0 0.0
    %2491 = vmatprep.subr.mxu0 0.0
    %2492 = vmatpush2.msra.mxu0 0.0
    %2493 = vmatprep.subr.mxu0 0.0
    %2494 = vmatpush2.msra.mxu0 0.0
    %2495 = vmatprep.subr.mxu0 0.0
    %2496 = vmatpush2.msra.mxu0 0.0
    %2497 = vmatprep.subr.mxu0 0.0
    %2498 = vmatpush2.msra.mxu0 0.0
    %2499 = vmatprep.subr.mxu0 0.0
    %2500 = vmatpush2.msra.mxu0 0.0
    %2501 = vmatprep.subr.mxu0 0.0
    %2502 = vmatpush2.msra.mxu0 0.0
    %2503 = vmatprep.subr.mxu0 0.0
    %2504 = vmatpush2.msra.mxu0 0.0
    %2505 = vmatprep.subr.mxu0 0.0
    %2506 = vmatpush2.msra.mxu0 0.0
    %2507 = vmatprep.subr.mxu0 0.0
    %2508 = vmatpush2.msra.mxu0 0.0
    %2509 = vmatprep.subr.mxu0 0.0
    %2510 = vmatpush2.msra.mxu0 0.0
    %2511 = vmatprep.subr.mxu0 0.0
    %2512 = vmatpush2.msra.mxu0 0.0
    %2513 = vmatprep.mubr.f32.mxu0 0.0
    %2514 = vmatmul.mubr.f32.gmra.mxu0 %v2378
    %v2515 = vpop.f32.mrf.mxu0
    %v2516 = vadd.f32 %v2259, %v2515
    %v2517 = vpop.f32.mrf.mxu0
    %2518 = vmatprep.mubr.f32.mxu0 0.0
    %2519 = vmatmul.mubr.f32.gmra.mxu0 %v2381
    %v2520 = vpop.f32.mrf.mxu0
    %v2521 = vadd.f32 %v2264, %v2520
    %v2522 = vpop.f32.mrf.mxu0
    %2523 = vmatprep.mubr.f32.mxu0 0.0
    %2524 = vmatmul.mubr.f32.gmra.mxu0 %v2384
    %v2525 = vpop.f32.mrf.mxu0
    %v2526 = vadd.f32 %v2269, %v2525
    %v2527 = vpop.f32.mrf.mxu0
    %2528 = vmatprep.mubr.f32.mxu0 0.0
    %2529 = vmatmul.mubr.f32.gmra.mxu0 %v2387
    %v2530 = vpop.f32.mrf.mxu0
    %v2531 = vadd.f32 %v2274, %v2530
    %v2532 = vpop.f32.mrf.mxu0
    %2533 = vmatprep.mubr.f32.mxu0 0.0
    %2534 = vmatmul.mubr.f32.gmra.mxu0 %v2390
    %v2535 = vpop.f32.mrf.mxu0
    %v2536 = vadd.f32 %v2279, %v2535
    %v2537 = vpop.f32.mrf.mxu0
    %2538 = vmatprep.mubr.f32.mxu0 0.0
    %2539 = vmatmul.mubr.f32.gmra.mxu0 %v2393
    %v2540 = vpop.f32.mrf.mxu0
    %v2541 = vadd.f32 %v2284, %v2540
    %v2542 = vpop.f32.mrf.mxu0
    %2543 = vmatprep.mubr.f32.mxu0 0.0
    %2544 = vmatmul.mubr.f32.gmra.mxu0 %v2396
    %v2545 = vpop.f32.mrf.mxu0
    %v2546 = vadd.f32 %v2289, %v2545
    %v2547 = vpop.f32.mrf.mxu0
    %2548 = vmatprep.mubr.f32.mxu0 0.0
    %2549 = vmatmul.mubr.f32.gmra.mxu0 %v2399
    %v2550 = vpop.f32.mrf.mxu0
    %v2551 = vadd.f32 %v2294, %v2550
    %v2552 = vpop.f32.mrf.mxu0
    %2553 = vmatprep.mubr.f32.mxu0 0.0
    %2554 = vmatmul.mubr.f32.gmra.mxu0 %v2402
    %v2555 = vpop.f32.mrf.mxu0
    %v2556 = vadd.f32 %v2299, %v2555
    %v2557 = vpop.f32.mrf.mxu0
    %2558 = vmatprep.mubr.f32.mxu0 0.0
    %2559 = vmatmul.mubr.f32.gmra.mxu0 %v2405
    %v2560 = vpop.f32.mrf.mxu0
    %v2561 = vadd.f32 %v2304, %v2560
    %v2562 = vpop.f32.mrf.mxu0
    %2563 = vmatprep.mubr.f32.mxu0 0.0
    %2564 = vmatmul.mubr.f32.gmra.mxu0 %v2408
    %v2565 = vpop.f32.mrf.mxu0
    %v2566 = vadd.f32 %v2309, %v2565
    %v2567 = vpop.f32.mrf.mxu0
    %2568 = vmatprep.mubr.f32.mxu0 0.0
    %2569 = vmatmul.mubr.f32.gmra.mxu0 %v2411
    %v2570 = vpop.f32.mrf.mxu0
    %v2571 = vadd.f32 %v2314, %v2570
    %v2572 = vpop.f32.mrf.mxu0
    %2573 = vmatprep.mubr.f32.mxu0 0.0
    %2574 = vmatmul.mubr.f32.gmra.mxu0 %v2414
    %v2575 = vpop.f32.mrf.mxu0
    %v2576 = vadd.f32 %v2319, %v2575
    %v2577 = vpop.f32.mrf.mxu0
    %2578 = vmatprep.mubr.f32.mxu0 0.0
    %2579 = vmatmul.mubr.f32.gmra.mxu0 %v2417
    %v2580 = vpop.f32.mrf.mxu0
    %v2581 = vadd.f32 %v2324, %v2580
    %v2582 = vpop.f32.mrf.mxu0
    %2583 = vmatprep.mubr.f32.mxu0 0.0
    %2584 = vmatmul.mubr.f32.gmra.mxu0 %v2420
    %v2585 = vpop.f32.mrf.mxu0
    %v2586 = vadd.f32 %v2329, %v2585
    %v2587 = vpop.f32.mrf.mxu0
    %2588 = vmatprep.mubr.f32.mxu0 0.0
    %2589 = vmatmul.mubr.f32.gmra.mxu0 %v2423
    %v2590 = vpop.f32.mrf.mxu0
    %v2591 = vadd.f32 %v2334, %v2590
    %v2592 = vpop.f32.mrf.mxu0
    %2593 = vmatprep.mubr.f32.mxu0 0.0
    %2594 = vmatmul.mubr.f32.gmra.mxu0 %v2426
    %v2595 = vpop.f32.mrf.mxu0
    %v2596 = vadd.f32 %v2339, %v2595
    %v2597 = vpop.f32.mrf.mxu0
    %2598 = vmatprep.mubr.f32.mxu0 0.0
    %2599 = vmatmul.mubr.f32.gmra.mxu0 %v2429
    %v2600 = vpop.f32.mrf.mxu0
    %v2601 = vadd.f32 %v2344, %v2600
    %v2602 = vpop.f32.mrf.mxu0
    %2603 = vmatprep.mubr.f32.mxu0 0.0
    %2604 = vmatmul.mubr.f32.gmra.mxu0 %v2432
    %v2605 = vpop.f32.mrf.mxu0
    %v2606 = vadd.f32 %v2349, %v2605
    %v2607 = vpop.f32.mrf.mxu0
    %2608 = vmatprep.mubr.f32.mxu0 0.0
    %2609 = vmatmul.mubr.f32.gmra.mxu0 %v2435
    %v2610 = vpop.f32.mrf.mxu0
    %v2611 = vadd.f32 %v2354, %v2610
    %v2612 = vpop.f32.mrf.mxu0
    %2613 = vmatprep.mubr.f32.mxu0 0.0
    %2614 = vmatmul.mubr.f32.gmra.mxu0 %v2438
    %v2615 = vpop.f32.mrf.mxu0
    %v2616 = vadd.f32 %v2359, %v2615
    %v2617 = vpop.f32.mrf.mxu0
    %2618 = vmatprep.mubr.f32.mxu0 0.0
    %2619 = vmatmul.mubr.f32.gmra.mxu0 %v2441
    %v2620 = vpop.f32.mrf.mxu0
    %v2621 = vadd.f32 %v2364, %v2620
    %v2622 = vpop.f32.mrf.mxu0
    %2623 = vmatprep.mubr.f32.mxu0 0.0
    %2624 = vmatmul.mubr.f32.gmra.mxu0 %v2444
    %v2625 = vpop.f32.mrf.mxu0
    %v2626 = vadd.f32 %v2369, %v2625
    %v2627 = vpop.f32.mrf.mxu0
    %2628 = vmatprep.mubr.f32.mxu0 0.0
    %2629 = vmatmul.mubr.f32.gmra.mxu0 %v2447
    %v2630 = vpop.f32.mrf.mxu0
    %v2631 = vadd.f32 %v2374, %v2630
    %v2632 = vpop.f32.mrf.mxu0
    %2633 = vdwg.mxu0
    %v2634 = vld [vmem:[#allocation2 + $0x9] sm:$0xff]
    %v2635 = vld [vmem:[#allocation2 + $0x11] sm:$0xff]
    %v2636 = vld [vmem:[#allocation2 + $0x19] sm:$0xff]
    %v2637 = vld [vmem:[#allocation2 + $0x21] sm:$0xff]
    %v2638 = vld [vmem:[#allocation2 + $0x29] sm:$0xff]
    %v2639 = vld [vmem:[#allocation2 + $0x31] sm:$0xff]
    %v2640 = vld [vmem:[#allocation2 + $0x39] sm:$0xff]
    %v2641 = vld [vmem:[#allocation2 + $0x41] sm:$0xff]
    %v2642 = vld [vmem:[#allocation2 + $0x49] sm:$0xff]
    %v2643 = vld [vmem:[#allocation2 + $0x51] sm:$0xff]
    %v2644 = vld [vmem:[#allocation2 + $0x59] sm:$0xff]
    %v2645 = vld [vmem:[#allocation2 + $0x61] sm:$0xff]
    %v2646 = vld [vmem:[#allocation2 + $0x69] sm:$0xff]
    %v2647 = vld [vmem:[#allocation2 + $0x71] sm:$0xff]
    %v2648 = vld [vmem:[#allocation2 + $0x79] sm:$0xff]
    %v2649 = vld [vmem:[#allocation2 + $0x81] sm:$0xff]
    %v2650 = vld [vmem:[#allocation2 + $0x89] sm:$0xff]
    %v2651 = vld [vmem:[#allocation2 + $0x91] sm:$0xff]
    %v2652 = vld [vmem:[#allocation2 + $0x99] sm:$0xff]
    %v2653 = vld [vmem:[#allocation2 + $0xa1] sm:$0xff]
    %v2654 = vld [vmem:[#allocation2 + $0xa9] sm:$0xff]
    %v2655 = vld [vmem:[#allocation2 + $0xb1] sm:$0xff]
    %v2656 = vld [vmem:[#allocation2 + $0xb9] sm:$0xff]
    %v2657 = vld [vmem:[#allocation2 + $0xc1] sm:$0xff]
    %s2658 = scalar_lea.vmem [#allocation3], 256
    %v2659 = vld [vmem:[%s2658] sm:$0xff]
    %v2660 = vld [vmem:[%s2658 + $0x8] sm:$0xff]
    %v2661 = vld [vmem:[%s2658 + $0x10] sm:$0xff]
    %v2662 = vld [vmem:[%s2658 + $0x18] sm:$0xff]
    %v2664 = vsel %vm54, %v2634, 0
    %v2667 = vsel %vm54, %v2635, 0
    %v2670 = vsel %vm54, %v2636, 0
    %v2673 = vsel %vm54, %v2637, 0
    %v2676 = vsel %vm54, %v2638, 0
    %v2679 = vsel %vm54, %v2639, 0
    %v2682 = vsel %vm54, %v2640, 0
    %v2685 = vsel %vm54, %v2641, 0
    %v2688 = vsel %vm54, %v2642, 0
    %v2691 = vsel %vm54, %v2643, 0
    %v2694 = vsel %vm54, %v2644, 0
    %v2697 = vsel %vm54, %v2645, 0
    %v2700 = vsel %vm54, %v2646, 0
    %v2703 = vsel %vm54, %v2647, 0
    %v2706 = vsel %vm54, %v2648, 0
    %v2709 = vsel %vm54, %v2649, 0
    %v2712 = vsel %vm54, %v2650, 0
    %v2715 = vsel %vm54, %v2651, 0
    %v2718 = vsel %vm54, %v2652, 0
    %v2721 = vsel %vm54, %v2653, 0
    %v2724 = vsel %vm54, %v2654, 0
    %v2727 = vsel %vm54, %v2655, 0
    %v2730 = vsel %vm54, %v2656, 0
    %v2733 = vsel %vm54, %v2657, 0
    %2735 = vmatprep.subr.mxu0 0.0
    %2736 = vmatpush1.msra.mxu0 0.0
    %2737 = vmatprep.subr.mxu0 0.0
    %2738 = vmatpush1.msra.mxu0 0.0
    %2739 = vmatprep.subr.mxu0 0.0
    %2740 = vmatpush1.msra.mxu0 0.0
    %2741 = vmatprep.subr.mxu0 0.0
    %2742 = vmatpush1.msra.mxu0 0.0
    %2743 = vmatprep.subr.mxu0 0.0
    %2744 = vmatpush1.msra.mxu0 0.0
    %2745 = vmatprep.subr.mxu0 0.0
    %2746 = vmatpush1.msra.mxu0 0.0
    %2747 = vmatprep.subr.mxu0 0.0
    %2748 = vmatpush1.msra.mxu0 0.0
    %2749 = vmatprep.subr.mxu0 0.0
    %2750 = vmatpush1.msra.mxu0 0.0
    %2751 = vmatprep.subr.mxu0 0.0
    %2752 = vmatpush1.msra.mxu0 0.0
    %2753 = vmatprep.subr.mxu0 0.0
    %2754 = vmatpush1.msra.mxu0 0.0
    %2755 = vmatprep.subr.mxu0 0.0
    %2756 = vmatpush1.msra.mxu0 0.0
    %2757 = vmatprep.subr.mxu0 0.0
    %2758 = vmatpush1.msra.mxu0 0.0
    %2759 = vmatprep.subr.mxu0 0.0
    %2760 = vmatpush1.msra.mxu0 %v2662
    %2761 = vmatprep.subr.mxu0 0.0
    %2762 = vmatpush1.msra.mxu0 %v2661
    %2763 = vmatprep.subr.mxu0 0.0
    %2764 = vmatpush1.msra.mxu0 %v2660
    %2765 = vmatprep.subr.mxu0 0.0
    %2766 = vmatpush1.msra.mxu0 %v2659
    %2767 = vmatprep.subr.mxu0 0.0
    %2768 = vmatpush2.msra.mxu0 0.0
    %2769 = vmatprep.subr.mxu0 0.0
    %2770 = vmatpush2.msra.mxu0 0.0
    %2771 = vmatprep.subr.mxu0 0.0
    %2772 = vmatpush2.msra.mxu0 0.0
    %2773 = vmatprep.subr.mxu0 0.0
    %2774 = vmatpush2.msra.mxu0 0.0
    %2775 = vmatprep.subr.mxu0 0.0
    %2776 = vmatpush2.msra.mxu0 0.0
    %2777 = vmatprep.subr.mxu0 0.0
    %2778 = vmatpush2.msra.mxu0 0.0
    %2779 = vmatprep.subr.mxu0 0.0
    %2780 = vmatpush2.msra.mxu0 0.0
    %2781 = vmatprep.subr.mxu0 0.0
    %2782 = vmatpush2.msra.mxu0 0.0
    %2783 = vmatprep.subr.mxu0 0.0
    %2784 = vmatpush2.msra.mxu0 0.0
    %2785 = vmatprep.subr.mxu0 0.0
    %2786 = vmatpush2.msra.mxu0 0.0
    %2787 = vmatprep.subr.mxu0 0.0
    %2788 = vmatpush2.msra.mxu0 0.0
    %2789 = vmatprep.subr.mxu0 0.0
    %2790 = vmatpush2.msra.mxu0 0.0
    %2791 = vmatprep.subr.mxu0 0.0
    %2792 = vmatpush2.msra.mxu0 0.0
    %2793 = vmatprep.subr.mxu0 0.0
    %2794 = vmatpush2.msra.mxu0 0.0
    %2795 = vmatprep.subr.mxu0 0.0
    %2796 = vmatpush2.msra.mxu0 0.0
    %2797 = vmatprep.subr.mxu0 0.0
    %2798 = vmatpush2.msra.mxu0 0.0
    %2799 = vmatprep.mubr.f32.mxu0 0.0
    %2800 = vmatmul.mubr.f32.gmra.mxu0 %v2664
    %v2801 = vpop.f32.mrf.mxu0
    %v2802 = vadd.f32 0.0, %v2801
    %v2803 = vpop.f32.mrf.mxu0
    %2804 = vmatprep.mubr.f32.mxu0 0.0
    %2805 = vmatmul.mubr.f32.gmra.mxu0 %v2667
    %v2806 = vpop.f32.mrf.mxu0
    %v2807 = vadd.f32 0.0, %v2806
    %v2808 = vpop.f32.mrf.mxu0
    %2809 = vmatprep.mubr.f32.mxu0 0.0
    %2810 = vmatmul.mubr.f32.gmra.mxu0 %v2670
    %v2811 = vpop.f32.mrf.mxu0
    %v2812 = vadd.f32 0.0, %v2811
    %v2813 = vpop.f32.mrf.mxu0
    %2814 = vmatprep.mubr.f32.mxu0 0.0
    %2815 = vmatmul.mubr.f32.gmra.mxu0 %v2673
    %v2816 = vpop.f32.mrf.mxu0
    %v2817 = vadd.f32 0.0, %v2816
    %v2818 = vpop.f32.mrf.mxu0
    %2819 = vmatprep.mubr.f32.mxu0 0.0
    %2820 = vmatmul.mubr.f32.gmra.mxu0 %v2676
    %v2821 = vpop.f32.mrf.mxu0
    %v2822 = vadd.f32 0.0, %v2821
    %v2823 = vpop.f32.mrf.mxu0
    %2824 = vmatprep.mubr.f32.mxu0 0.0
    %2825 = vmatmul.mubr.f32.gmra.mxu0 %v2679
    %v2826 = vpop.f32.mrf.mxu0
    %v2827 = vadd.f32 0.0, %v2826
    %v2828 = vpop.f32.mrf.mxu0
    %2829 = vmatprep.mubr.f32.mxu0 0.0
    %2830 = vmatmul.mubr.f32.gmra.mxu0 %v2682
    %v2831 = vpop.f32.mrf.mxu0
    %v2832 = vadd.f32 0.0, %v2831
    %v2833 = vpop.f32.mrf.mxu0
    %2834 = vmatprep.mubr.f32.mxu0 0.0
    %2835 = vmatmul.mubr.f32.gmra.mxu0 %v2685
    %v2836 = vpop.f32.mrf.mxu0
    %v2837 = vadd.f32 0.0, %v2836
    %v2838 = vpop.f32.mrf.mxu0
    %2839 = vmatprep.mubr.f32.mxu0 0.0
    %2840 = vmatmul.mubr.f32.gmra.mxu0 %v2688
    %v2841 = vpop.f32.mrf.mxu0
    %v2842 = vadd.f32 0.0, %v2841
    %v2843 = vpop.f32.mrf.mxu0
    %2844 = vmatprep.mubr.f32.mxu0 0.0
    %2845 = vmatmul.mubr.f32.gmra.mxu0 %v2691
    %v2846 = vpop.f32.mrf.mxu0
    %v2847 = vadd.f32 0.0, %v2846
    %v2848 = vpop.f32.mrf.mxu0
    %2849 = vmatprep.mubr.f32.mxu0 0.0
    %2850 = vmatmul.mubr.f32.gmra.mxu0 %v2694
    %v2851 = vpop.f32.mrf.mxu0
    %v2852 = vadd.f32 0.0, %v2851
    %v2853 = vpop.f32.mrf.mxu0
    %2854 = vmatprep.mubr.f32.mxu0 0.0
    %2855 = vmatmul.mubr.f32.gmra.mxu0 %v2697
    %v2856 = vpop.f32.mrf.mxu0
    %v2857 = vadd.f32 0.0, %v2856
    %v2858 = vpop.f32.mrf.mxu0
    %2859 = vmatprep.mubr.f32.mxu0 0.0
    %2860 = vmatmul.mubr.f32.gmra.mxu0 %v2700
    %v2861 = vpop.f32.mrf.mxu0
    %v2862 = vadd.f32 0.0, %v2861
    %v2863 = vpop.f32.mrf.mxu0
    %2864 = vmatprep.mubr.f32.mxu0 0.0
    %2865 = vmatmul.mubr.f32.gmra.mxu0 %v2703
    %v2866 = vpop.f32.mrf.mxu0
    %v2867 = vadd.f32 0.0, %v2866
    %v2868 = vpop.f32.mrf.mxu0
    %2869 = vmatprep.mubr.f32.mxu0 0.0
    %2870 = vmatmul.mubr.f32.gmra.mxu0 %v2706
    %v2871 = vpop.f32.mrf.mxu0
    %v2872 = vadd.f32 0.0, %v2871
    %v2873 = vpop.f32.mrf.mxu0
    %2874 = vmatprep.mubr.f32.mxu0 0.0
    %2875 = vmatmul.mubr.f32.gmra.mxu0 %v2709
    %v2876 = vpop.f32.mrf.mxu0
    %v2877 = vadd.f32 0.0, %v2876
    %v2878 = vpop.f32.mrf.mxu0
    %2879 = vmatprep.mubr.f32.mxu0 0.0
    %2880 = vmatmul.mubr.f32.gmra.mxu0 %v2712
    %v2881 = vpop.f32.mrf.mxu0
    %v2882 = vadd.f32 0.0, %v2881
    %v2883 = vpop.f32.mrf.mxu0
    %2884 = vmatprep.mubr.f32.mxu0 0.0
    %2885 = vmatmul.mubr.f32.gmra.mxu0 %v2715
    %v2886 = vpop.f32.mrf.mxu0
    %v2887 = vadd.f32 0.0, %v2886
    %v2888 = vpop.f32.mrf.mxu0
    %2889 = vmatprep.mubr.f32.mxu0 0.0
    %2890 = vmatmul.mubr.f32.gmra.mxu0 %v2718
    %v2891 = vpop.f32.mrf.mxu0
    %v2892 = vadd.f32 0.0, %v2891
    %v2893 = vpop.f32.mrf.mxu0
    %2894 = vmatprep.mubr.f32.mxu0 0.0
    %2895 = vmatmul.mubr.f32.gmra.mxu0 %v2721
    %v2896 = vpop.f32.mrf.mxu0
    %v2897 = vadd.f32 0.0, %v2896
    %v2898 = vpop.f32.mrf.mxu0
    %2899 = vmatprep.mubr.f32.mxu0 0.0
    %2900 = vmatmul.mubr.f32.gmra.mxu0 %v2724
    %v2901 = vpop.f32.mrf.mxu0
    %v2902 = vadd.f32 0.0, %v2901
    %v2903 = vpop.f32.mrf.mxu0
    %2904 = vmatprep.mubr.f32.mxu0 0.0
    %2905 = vmatmul.mubr.f32.gmra.mxu0 %v2727
    %v2906 = vpop.f32.mrf.mxu0
    %v2907 = vadd.f32 0.0, %v2906
    %v2908 = vpop.f32.mrf.mxu0
    %2909 = vmatprep.mubr.f32.mxu0 0.0
    %2910 = vmatmul.mubr.f32.gmra.mxu0 %v2730
    %v2911 = vpop.f32.mrf.mxu0
    %v2912 = vadd.f32 0.0, %v2911
    %v2913 = vpop.f32.mrf.mxu0
    %2914 = vmatprep.mubr.f32.mxu0 0.0
    %2915 = vmatmul.mubr.f32.gmra.mxu0 %v2733
    %v2916 = vpop.f32.mrf.mxu0
    %v2917 = vadd.f32 0.0, %v2916
    %v2918 = vpop.f32.mrf.mxu0
    %2919 = vdwg.mxu0
    %v2920 = vadd.f32 %v2516, %v2802
    %v2921 = vadd.f32 %v2521, %v2807
    %v2922 = vadd.f32 %v2526, %v2812
    %v2923 = vadd.f32 %v2531, %v2817
    %v2924 = vadd.f32 %v2536, %v2822
    %v2925 = vadd.f32 %v2541, %v2827
    %v2926 = vadd.f32 %v2546, %v2832
    %v2927 = vadd.f32 %v2551, %v2837
    %v2928 = vadd.f32 %v2556, %v2842
    %v2929 = vadd.f32 %v2561, %v2847
    %v2930 = vadd.f32 %v2566, %v2852
    %v2931 = vadd.f32 %v2571, %v2857
    %v2932 = vadd.f32 %v2576, %v2862
    %v2933 = vadd.f32 %v2581, %v2867
    %v2934 = vadd.f32 %v2586, %v2872
    %v2935 = vadd.f32 %v2591, %v2877
    %v2936 = vadd.f32 %v2596, %v2882
    %v2937 = vadd.f32 %v2601, %v2887
    %v2938 = vadd.f32 %v2606, %v2892
    %v2939 = vadd.f32 %v2611, %v2897
    %v2940 = vadd.f32 %v2616, %v2902
    %v2941 = vadd.f32 %v2621, %v2907
    %v2942 = vadd.f32 %v2626, %v2912
    %v2943 = vadd.f32 %v2631, %v2917
    %s2944 = scalar_lea.vmem %s2, 2
    %v2945 = vld [vmem:[%s2944] sm:$0x1]
    %v2947 = vlaneseq
    %v2948 = vshrl.u32 %v2947, 7
    %v2949 = vsub.s32 0, %v2948
    %v2950 = vrot.slane %v2945, %v2949
    %v2952 = vadd.f32 %v2920, %v2950
    %v2953 = vadd.f32 %v2921, %v2950
    %v2954 = vadd.f32 %v2922, %v2950
    %v2955 = vadd.f32 %v2923, %v2950
    %v2956 = vadd.f32 %v2924, %v2950
    %v2957 = vadd.f32 %v2925, %v2950
    %v2958 = vadd.f32 %v2926, %v2950
    %v2959 = vadd.f32 %v2927, %v2950
    %v2960 = vadd.f32 %v2928, %v2950
    %v2961 = vadd.f32 %v2929, %v2950
    %v2962 = vadd.f32 %v2930, %v2950
    %v2963 = vadd.f32 %v2931, %v2950
    %v2964 = vadd.f32 %v2932, %v2950
    %v2965 = vadd.f32 %v2933, %v2950
    %v2966 = vadd.f32 %v2934, %v2950
    %v2967 = vadd.f32 %v2935, %v2950
    %v2968 = vadd.f32 %v2936, %v2950
    %v2969 = vadd.f32 %v2937, %v2950
    %v2970 = vadd.f32 %v2938, %v2950
    %v2971 = vadd.f32 %v2939, %v2950
    %v2972 = vadd.f32 %v2940, %v2950
    %v2973 = vadd.f32 %v2941, %v2950
    %v2974 = vadd.f32 %v2942, %v2950
    %v2975 = vadd.f32 %v2943, %v2950
    %v2976 = vmax.f32 %v2952, 0.0
    %v2977 = vmax.f32 %v2953, 0.0
    %v2978 = vmax.f32 %v2954, 0.0
    %v2979 = vmax.f32 %v2955, 0.0
    %v2980 = vmax.f32 %v2956, 0.0
    %v2981 = vmax.f32 %v2957, 0.0
    %v2982 = vmax.f32 %v2958, 0.0
    %v2983 = vmax.f32 %v2959, 0.0
    %v2984 = vmax.f32 %v2960, 0.0
    %v2985 = vmax.f32 %v2961, 0.0
    %v2986 = vmax.f32 %v2962, 0.0
    %v2987 = vmax.f32 %v2963, 0.0
    %v2988 = vmax.f32 %v2964, 0.0
    %v2989 = vmax.f32 %v2965, 0.0
    %v2990 = vmax.f32 %v2966, 0.0
    %v2991 = vmax.f32 %v2967, 0.0
    %v2992 = vmax.f32 %v2968, 0.0
    %v2993 = vmax.f32 %v2969, 0.0
    %v2994 = vmax.f32 %v2970, 0.0
    %v2995 = vmax.f32 %v2971, 0.0
    %v2996 = vmax.f32 %v2972, 0.0
    %v2997 = vmax.f32 %v2973, 0.0
    %v2998 = vmax.f32 %v2974, 0.0
    %v2999 = vmax.f32 %v2975, 0.0
    %v3000 = vsel %vm1025, %v2976, 0.0
    %v3001 = vsel %vm1026, %v2977, 0.0
    %v3002 = vsel %vm1027, %v2978, 0.0
    %v3003 = vsel %vm1025, %v2979, 0.0
    %v3004 = vsel %vm1026, %v2980, 0.0
    %v3005 = vsel %vm1027, %v2981, 0.0
    %v3006 = vsel %vm1025, %v2982, 0.0
    %v3007 = vsel %vm1026, %v2983, 0.0
    %v3008 = vsel %vm1027, %v2984, 0.0
    %v3009 = vsel %vm1025, %v2985, 0.0
    %v3010 = vsel %vm1026, %v2986, 0.0
    %v3011 = vsel %vm1027, %v2987, 0.0
    %v3012 = vsel %vm1025, %v2988, 0.0
    %v3013 = vsel %vm1026, %v2989, 0.0
    %v3014 = vsel %vm1027, %v2990, 0.0
    %v3015 = vsel %vm1025, %v2991, 0.0
    %v3016 = vsel %vm1026, %v2992, 0.0
    %v3017 = vsel %vm1027, %v2993, 0.0
    %v3018 = vsel %vm1025, %v2994, 0.0
    %v3019 = vsel %vm1026, %v2995, 0.0
    %v3020 = vsel %vm1027, %v2996, 0.0
    %v3021 = vsel %vm1025, %v2997, 0.0
    %v3022 = vsel %vm1026, %v2998, 0.0
    %v3023 = vsel %vm1027, %v2999, 0.0
    %v3024 = vmax.f32 %v3000, %v3001
    %v3025 = vmax.f32 %v3024, %v3002
    %v3026 = vrot.slane %v3025, 4
    %v3027 = vmax.f32 %v3025, %v3026
    %v3028 = vrot.slane %v3027, 2
    %v3029 = vmax.f32 %v3027, %v3028
    %v3030 = vrot.slane %v3029, 1
    %v3031 = vmax.f32 %v3029, %v3030
    %v3032 = vmax.f32 %v3003, %v3004
    %v3033 = vmax.f32 %v3032, %v3005
    %v3034 = vrot.slane %v3033, 4
    %v3035 = vmax.f32 %v3033, %v3034
    %v3036 = vrot.slane %v3035, 2
    %v3037 = vmax.f32 %v3035, %v3036
    %v3038 = vrot.slane %v3037, 1
    %v3039 = vmax.f32 %v3037, %v3038
    %v3040 = vmax.f32 %v3006, %v3007
    %v3041 = vmax.f32 %v3040, %v3008
    %v3042 = vrot.slane %v3041, 4
    %v3043 = vmax.f32 %v3041, %v3042
    %v3044 = vrot.slane %v3043, 2
    %v3045 = vmax.f32 %v3043, %v3044
    %v3046 = vrot.slane %v3045, 1
    %v3047 = vmax.f32 %v3045, %v3046
    %v3048 = vmax.f32 %v3009, %v3010
    %v3049 = vmax.f32 %v3048, %v3011
    %v3050 = vrot.slane %v3049, 4
    %v3051 = vmax.f32 %v3049, %v3050
    %v3052 = vrot.slane %v3051, 2
    %v3053 = vmax.f32 %v3051, %v3052
    %v3054 = vrot.slane %v3053, 1
    %v3055 = vmax.f32 %v3053, %v3054
    %v3056 = vmax.f32 %v3012, %v3013
    %v3057 = vmax.f32 %v3056, %v3014
    %v3058 = vrot.slane %v3057, 4
    %v3059 = vmax.f32 %v3057, %v3058
    %v3060 = vrot.slane %v3059, 2
    %v3061 = vmax.f32 %v3059, %v3060
    %v3062 = vrot.slane %v3061, 1
    %v3063 = vmax.f32 %v3061, %v3062
    %v3064 = vmax.f32 %v3015, %v3016
    %v3065 = vmax.f32 %v3064, %v3017
    %v3066 = vrot.slane %v3065, 4
    %v3067 = vmax.f32 %v3065, %v3066
    %v3068 = vrot.slane %v3067, 2
    %v3069 = vmax.f32 %v3067, %v3068
    %v3070 = vrot.slane %v3069, 1
    %v3071 = vmax.f32 %v3069, %v3070
    %v3072 = vmax.f32 %v3018, %v3019
    %v3073 = vmax.f32 %v3072, %v3020
    %v3074 = vrot.slane %v3073, 4
    %v3075 = vmax.f32 %v3073, %v3074
    %v3076 = vrot.slane %v3075, 2
    %v3077 = vmax.f32 %v3075, %v3076
    %v3078 = vrot.slane %v3077, 1
    %v3079 = vmax.f32 %v3077, %v3078
    %v3080 = vmax.f32 %v3021, %v3022
    %v3081 = vmax.f32 %v3080, %v3023
    %v3082 = vrot.slane %v3081, 4
    %v3083 = vmax.f32 %v3081, %v3082
    %v3084 = vrot.slane %v3083, 2
    %v3085 = vmax.f32 %v3083, %v3084
    %v3086 = vrot.slane %v3085, 1
    %v3087 = vmax.f32 %v3085, %v3086
    %vm3096 = vcmask 1041409
    %v3097 = vsel %vm3096, %v3039, %v3031
    %vm3098 = vcmask 1042434
    %v3099 = vsel %vm3098, %v3047, %v3097
    %vm3100 = vcmask 1043459
    %v3101 = vsel %vm3100, %v3055, %v3099
    %vm3102 = vcmask 1044484
    %v3103 = vsel %vm3102, %v3063, %v3101
    %vm3104 = vcmask 1045509
    %v3105 = vsel %vm3104, %v3071, %v3103
    %vm3106 = vcmask 1046534
    %v3107 = vsel %vm3106, %v3079, %v3105
    %vm3108 = vcmask 1047559
    %v3109 = vsel %vm3108, %v3087, %v3107
    %3111 = vst [vmem:[%s3] sm:$0xff] %v3109
    // Predicated region
    $region18: #{stack_cnn.1} parent=1 // pred_check
      _
    $region19: #{stack_cnn.1} parent=1 // pred_check_branch
      %3113 = sbr.rel (0) target = $region21
    $region20: #{stack_cnn.1} parent=1 // pred_region
      _
    $region21: #{stack_cnn.1} parent=1 // pred_fallthru
      _
    // Predicated region
    $region22: #{stack_cnn.1} parent=1 // pred_check
      _
    $region23: #{stack_cnn.1} parent=1 // pred_check_branch
      %3115 = sbr.rel (0) target = $region25
    $region24: #{stack_cnn.1} parent=1 // pred_region
      _
    $region25: #{stack_cnn.1} parent=1 // pred_fallthru
      _
    %3116 = vsyncpa [#allocation4], 1

</llo_original>
